<compile_context>
chip_gen: v6e
topology: v6e:2x2x1
jax: 0.10.0
libtpu: 0.0.40
codegen_flags: <defaults>
</compile_context>

<pallas_src>
import math
import functools

import jax
import jax.numpy as jnp
from jax import lax
from jax.experimental import pallas as pl
from jax.experimental.pallas import tpu as pltpu


def _layernorm_f32(x, gamma, beta, eps=1e-5):
    # PyTorch nn.LayerNorm: biased variance over the last dim, stats in f32.
    x = x.astype(jnp.float32)
    mean = jnp.mean(x, axis=-1, keepdims=True)
    var = jnp.mean((x - mean) ** 2, axis=-1, keepdims=True)
    return (x - mean) * lax.rsqrt(var + eps) * gamma.astype(jnp.float32) \
        + beta.astype(jnp.float32)


def _transformer_block_kernel(
    v_ref, k_ref, q_ref, qres_ref,
    wo_h_ref, bo_ref,
    g1_ref, be1_ref,
    w1_t_ref, b1_ref,
    w2_t_ref, b2_ref,
    g2_ref, be2_ref,
    o_ref,
    acc_ref,
    *, scale: float,
):
    # grid = (batch_block, head); one head's attention per step.
    h = pl.program_id(1)
    last_h = pl.num_programs(1) - 1
    Bn, _, S, D = q_ref.shape
    E = o_ref.shape[-1]
    R = Bn * S
    cdt = q_ref.dtype                         # matmul operand dtype (bf16 fast path ok)

    @pl.when(h == 0)
    def _init():
        acc_ref[...] = jnp.zeros_like(acc_ref)

    # ---- one head's attention: only this head's (Bn,S,S) scores are live ----
    qh = q_ref[...].reshape(Bn, S, D) * jnp.asarray(scale, cdt)  # fold 1/sqrt(E) into q
    kh = k_ref[...].reshape(Bn, S, D)
    vh = v_ref[...].reshape(Bn, S, D)

    s = lax.dot_general(qh, kh, (((2,), (2,)), ((0,), (0,))),
                        preferred_element_type=jnp.float32)      # (Bn,S,S) f32
    s = s - jnp.max(s, axis=-1, keepdims=True)
    p = jnp.exp(s)
    denom = jnp.sum(p, axis=-1, keepdims=True)                   # (Bn,S,1)
    oh = lax.dot_general(p.astype(cdt), vh, (((2,), (1,)), ((0,), (0,))),
                         preferred_element_type=jnp.float32)     # (Bn,S,D) f32
    # deferred softmax normalization: S*D multiplies instead of S*S; EUP slot.
    oh = oh * pl.reciprocal(denom, approx=True)

    # ---- per-head partial output projection, accumulated over the head axis ----
    acc_ref[...] += jnp.dot(oh.reshape(R, D).astype(cdt), wo_h_ref[...],
                            preferred_element_type=jnp.float32)

    # ---- last head: bias + residual + LN1 + FFN + residual + LN2 ----
    @pl.when(h == last_h)
    def _finish():
        proj = acc_ref[...] + bo_ref[...].astype(jnp.float32)
        x = _layernorm_f32(
            proj + qres_ref[...].reshape(R, E).astype(jnp.float32),
            g1_ref[...], be1_ref[...])                           # (R,E) f32
        h1 = jnp.dot(x.astype(cdt), w1_t_ref[...],
                     preferred_element_type=jnp.float32)
        h1 = jnp.maximum(h1 + b1_ref[...].astype(jnp.float32), 0.0)
        ff = jnp.dot(h1.astype(cdt), w2_t_ref[...],
                     preferred_element_type=jnp.float32)
        ff = ff + b2_ref[...].astype(jnp.float32)
        y = _layernorm_f32(ff + x, g2_ref[...], be2_ref[...])
        o_ref[...] = y.reshape(Bn, S, E).astype(o_ref.dtype)


def _vmem_limit_bytes() -> int:
    """~85% of this generation's VMEM (fallback: 64 MiB, the v7x per-TC size)."""
    cap = None
    try:
        cap = getattr(pltpu.get_tpu_info(), "vmem_capacity_bytes", None)
    except Exception:
        cap = None
    if not cap:
        cap = 64 * 2 ** 20
    return int(cap * 0.85)


def transformer_block(value, key, query, params, *, heads: int,
                      batch_block: int | None = None, compute_dtype=None):
    """value/key/query: (N, S, E). Returns (N, S, E) in the input dtype.

    compute_dtype: optional accuracy/perf flag — e.g. jnp.bfloat16 to run all
    MXU matmuls in bf16 with f32 accumulation even for f32 inputs.
    """
    N, S, E = query.shape
    assert E % heads == 0, "embed_size must be divisible by heads"
    D = E // heads
    Hid = params["w1"].shape[0]
    out_dtype = query.dtype
    cdt = jnp.dtype(compute_dtype) if compute_dtype is not None else jnp.dtype(out_dtype)

    # Head-major activation layout: head index is a leading (non-lane) axis so
    # per-head BlockSpec slicing is free (no masked lane loads / relayouts).
    def to_heads(x):
        return x.reshape(N, S, heads, D).transpose(0, 2, 1, 3).astype(cdt)

    v_h, k_h, q_h = to_heads(value), to_heads(key), to_heads(query)
    q_res = query.astype(cdt)                     # residual path keeps (N,S,E) layout

    # Weights pre-transposed so the kernel only does lane-contracted x @ W.
    wo_t = params["wo"].T.astype(cdt)             # (E, E); rows [h*D:(h+1)*D] pair with head h
    w1_t = params["w1"].T.astype(cdt)             # (E, Hid)
    w2_t = params["w2"].T.astype(cdt)             # (Hid, E)
    bo = params["bo"].reshape(1, E).astype(jnp.float32)
    g1 = params["ln1_w"].reshape(1, E).astype(jnp.float32)
    be1 = params["ln1_b"].reshape(1, E).astype(jnp.float32)
    b1 = params["b1"].reshape(1, Hid).astype(jnp.float32)
    b2 = params["b2"].reshape(1, E).astype(jnp.float32)
    g2 = params["ln2_w"].reshape(1, E).astype(jnp.float32)
    be2 = params["ln2_b"].reshape(1, E).astype(jnp.float32)

    # Bn: ~256 rows per step (fills the 256-wide v6e/v7x MXU; fine on v5e), but
    # keep >= 2 batch-grid steps so both v7x TensorCores get work, and make Bn
    # divide N so there is no ragged (uninitialized) last block.
    if batch_block is None:
        batch_block = max(1, min(N, 256 // max(S, 1)))
        if N >= 2:
            batch_block = min(batch_block, max(1, N // 2))
    Bn = max(1, min(batch_block, N))
    while N % Bn:
        Bn -= 1
    R = Bn * S
    grid = (N // Bn, heads)

    head_spec = pl.BlockSpec((Bn, 1, S, D), lambda n, h: (n, h, 0, 0))
    res_spec = pl.BlockSpec((Bn, S, E), lambda n, h: (n, 0, 0))
    wo_spec = pl.BlockSpec((D, E), lambda n, h: (h, 0))

    isz = jnp.dtype(cdt).itemsize
    cost = pl.CostEstimate(
        flops=int(N * (4 * heads * S * S * D + 2 * S * E * E + 4 * S * E * Hid)),
        transcendentals=int(N * heads * S * S),
        bytes_accessed=int((5 * N * S * E + E * E + 2 * E * Hid) * isz),
    )

    kernel = functools.partial(_transformer_block_kernel,
                               scale=1.0 / math.sqrt(float(E)))

    def build(single_buffer_weights: bool):
        def const_spec(shape):
            # Grid-invariant weights/biases: single-buffer to halve weight VMEM.
            if single_buffer_weights:
                return pl.BlockSpec(shape, lambda n, h: (0, 0),
                                    pipeline_mode=pl.Buffered(1))
            return pl.BlockSpec(shape, lambda n, h: (0, 0))

        return pl.pallas_call(
            kernel,
            out_shape=jax.ShapeDtypeStruct((N, S, E), out_dtype),
            grid_spec=pltpu.PrefetchScalarGridSpec(
                num_scalar_prefetch=0,
                grid=grid,
                in_specs=[
                    head_spec, head_spec, head_spec,            # value, key, query (head-major)
                    res_spec,                                   # query (residual layout)
                    wo_spec, const_spec((1, E)),                # fc_out: per-head W rows, bias
                    const_spec((1, E)), const_spec((1, E)),     # norm1 w, b
                    const_spec((E, Hid)), const_spec((1, Hid)), # fc1
                    const_spec((Hid, E)), const_spec((1, E)),   # fc2
                    const_spec((1, E)), const_spec((1, E)),     # norm2 w, b
                ],
                out_specs=res_spec,
                scratch_shapes=[pltpu.VMEM((R, E), jnp.float32)],  # projection accumulator
            ),
            compiler_params=pltpu.CompilerParams(
                dimension_semantics=("parallel", "arbitrary"),
                vmem_limit_bytes=_vmem_limit_bytes()),
            cost_estimate=cost,
        )

    args = (v_h, k_h, q_h, q_res, wo_t, bo, g1, be1, w1_t, b1, w2_t, b2, g2, be2)
    try:
        return jax.block_until_ready(build(True)(*args))
    except Exception:
        # pl.Buffered(1) not supported on this jax build -> default pipelining.
        return jax.block_until_ready(build(False)(*args))


def _reference(value, key, query, params, *, heads: int):
    """Pure-JAX reference mirroring the PyTorch forward (mask=None, eval)."""
    N, S, E = query.shape
    D = E // heads
    q = query.reshape(N, S, heads, D)
    k = key.reshape(N, S, heads, D)
    v = value.reshape(N, S, heads, D)
    energy = jnp.einsum("nqhd,nkhd->nhqk", q, k)
    attn = jax.nn.softmax(energy / math.sqrt(float(E)), axis=3)
    out = jnp.einsum("nhql,nlhd->nqhd", attn, v).reshape(N, S, E)
    out = out @ params["wo"].T + params["bo"]

    def ln(x, w, b, eps=1e-5):
        m = jnp.mean(x, -1, keepdims=True)
        var = jnp.mean((x - m) ** 2, -1, keepdims=True)
        return (x - m) * jax.lax.rsqrt(var + eps) * w + b

    x = ln(out + query, params["ln1_w"], params["ln1_b"])
    h = jax.nn.relu(x @ params["w1"].T + params["b1"])
    ff = h @ params["w2"].T + params["b2"]
    return ln(ff + x, params["ln2_w"], params["ln2_b"])


if __name__ == "__main__":
    # Small shapes consistent with the module.
    N, S, E = 2, 8, 32
    heads, forward_expansion = 4, 4
    Hid = forward_expansion * E

    root = jax.random.PRNGKey(0)
    ks = jax.random.split(root, 10)

    value = jax.random.normal(ks[0], (N, S, E), jnp.float32)
    key = jax.random.normal(ks[1], (N, S, E), jnp.float32)
    query = jax.random.normal(ks[2], (N, S, E), jnp.float32)

    def lin_init(k, out_f, in_f):
        bound = 1.0 / math.sqrt(in_f)
        kw, kb = jax.random.split(k)
        w = jax.random.uniform(kw, (out_f, in_f), jnp.float32, -bound, bound)
        b = jax.random.uniform(kb, (out_f,), jnp.float32, -bound, bound)
        return w, b

    wo, bo = lin_init(ks[3], E, E)        # fc_out
    w1, b1 = lin_init(ks[4], Hid, E)      # feed_forward.fc1
    w2, b2 = lin_init(ks[5], E, Hid)      # feed_forward.fc2

    params = dict(
        wo=wo, bo=bo,
        ln1_w=jnp.ones((E,), jnp.float32), ln1_b=jnp.zeros((E,), jnp.float32),
        w1=w1, b1=b1, w2=w2, b2=b2,
        ln2_w=jnp.ones((E,), jnp.float32), ln2_b=jnp.zeros((E,), jnp.float32),
    )

    out = transformer_block(value, key, query, params, heads=heads)
    out = jax.block_until_ready(out)

    ref = _reference(value, key, query, params, heads=heads)
    assert out.shape == (N, S, E)
    # approx-reciprocal softmax denominator => ~1e-3-level deviation tolerated
    assert jnp.allclose(out, ref, rtol=3e-3, atol=3e-3), "mismatch vs JAX reference"

    print("KERNEL_OK")
</pallas_src>

<mosaic_0001>
module attributes {stable_mosaic.version = 11 : i64} {
  func.func @_transformer_block_kernel(%arg0: i32, %arg1: i32, %arg2: memref<1x1x8x8xf32, #tpu.memory_space<vmem>>, %arg3: memref<1x1x8x8xf32, #tpu.memory_space<vmem>>, %arg4: memref<1x1x8x8xf32, #tpu.memory_space<vmem>>, %arg5: memref<1x8x32xf32, #tpu.memory_space<vmem>>, %arg6: memref<8x32xf32, #tpu.memory_space<vmem>>, %arg7: memref<1x32xf32, #tpu.memory_space<vmem>>, %arg8: memref<1x32xf32, #tpu.memory_space<vmem>>, %arg9: memref<1x32xf32, #tpu.memory_space<vmem>>, %arg10: memref<32x128xf32, #tpu.memory_space<vmem>>, %arg11: memref<1x128xf32, #tpu.memory_space<vmem>>, %arg12: memref<128x32xf32, #tpu.memory_space<vmem>>, %arg13: memref<1x32xf32, #tpu.memory_space<vmem>>, %arg14: memref<1x32xf32, #tpu.memory_space<vmem>>, %arg15: memref<1x32xf32, #tpu.memory_space<vmem>>, %arg16: memref<1x8x32xf32, #tpu.memory_space<vmem>>, %arg17: memref<8x32xf32, #tpu.memory_space<vmem>>) attributes {dimension_semantics = [#tpu.dimension_semantics<parallel>, #tpu.dimension_semantics<arbitrary>], iteration_bounds = array<i64: 2, 4>, scalar_prefetch = 0 : i64, scratch_operands = 1 : i64, tpu.core_type = #tpu.core_type<tc>, window_params = [{transform_indices = @transform_0, window_bounds = array<i64: 1, 1, 8, 8>}, {transform_indices = @transform_1, window_bounds = array<i64: 1, 1, 8, 8>}, {transform_indices = @transform_2, window_bounds = array<i64: 1, 1, 8, 8>}, {transform_indices = @transform_3, window_bounds = array<i64: 1, 8, 32>}, {transform_indices = @transform_4, window_bounds = array<i64: 8, 32>}, {pipeline_mode = #tpu.pipeline_mode<synchronous>, transform_indices = @transform_5, window_bounds = array<i64: 1, 32>}, {pipeline_mode = #tpu.pipeline_mode<synchronous>, transform_indices = @transform_6, window_bounds = array<i64: 1, 32>}, {pipeline_mode = #tpu.pipeline_mode<synchronous>, transform_indices = @transform_7, window_bounds = array<i64: 1, 32>}, {pipeline_mode = #tpu.pipeline_mode<synchronous>, transform_indices = @transform_8, window_bounds = array<i64: 32, 128>}, {pipeline_mode = #tpu.pipeline_mode<synchronous>, transform_indices = @transform_9, window_bounds = array<i64: 1, 128>}, {pipeline_mode = #tpu.pipeline_mode<synchronous>, transform_indices = @transform_10, window_bounds = array<i64: 128, 32>}, {pipeline_mode = #tpu.pipeline_mode<synchronous>, transform_indices = @transform_11, window_bounds = array<i64: 1, 32>}, {pipeline_mode = #tpu.pipeline_mode<synchronous>, transform_indices = @transform_12, window_bounds = array<i64: 1, 32>}, {pipeline_mode = #tpu.pipeline_mode<synchronous>, transform_indices = @transform_13, window_bounds = array<i64: 1, 32>}, {transform_indices = @transform_14, window_bounds = array<i64: 1, 8, 32>}]} {
    %c0_i32 = arith.constant 0 : i32
    %0 = arith.cmpi eq, %arg1, %c0_i32 : i32
    %1 = arith.extui %0 : i1 to i32
    %c0_i32_0 = arith.constant 0 : i32
    %2 = arith.cmpi ne, %1, %c0_i32_0 : i32
    scf.if %2 {
      %cst_24 = arith.constant 0.000000e+00 : f32
      %32 = vector.broadcast %cst_24 : f32 to vector<8x32xf32>
      %c0_25 = arith.constant 0 : index
      %c0_26 = arith.constant 0 : index
      %33 = vector.load %arg17[%c0_25, %c0_26] : memref<8x32xf32, #tpu.memory_space<vmem>>, vector<8x32xf32>
      tpu.vector_store %arg17[%c0_25, %c0_26], %32 {strides = array<i32>} : memref<8x32xf32, #tpu.memory_space<vmem>>, vector<8x32xf32>,
    } else {
    }
    %c0 = arith.constant 0 : index
    %c0_1 = arith.constant 0 : index
    %c0_2 = arith.constant 0 : index
    %c0_3 = arith.constant 0 : index
    %3 = vector.load %arg4[%c0, %c0_1, %c0_2, %c0_3] : memref<1x1x8x8xf32, #tpu.memory_space<vmem>>, vector<1x1x8x8xf32>
    %4 = vector.shape_cast %3 : vector<1x1x8x8xf32> to vector<1x8x8xf32>
    %cst = arith.constant 0.176776692 : f32
    %5 = vector.broadcast %cst : f32 to vector<1x8x8xf32>
    %6 = arith.mulf %4, %5 : vector<1x8x8xf32>
    %c0_4 = arith.constant 0 : index
    %c0_5 = arith.constant 0 : index
    %c0_6 = arith.constant 0 : index
    %c0_7 = arith.constant 0 : index
    %7 = vector.load %arg3[%c0_4, %c0_5, %c0_6, %c0_7] : memref<1x1x8x8xf32, #tpu.memory_space<vmem>>, vector<1x1x8x8xf32>
    %8 = vector.shape_cast %7 : vector<1x1x8x8xf32> to vector<1x8x8xf32>
    %c0_8 = arith.constant 0 : index
    %c0_9 = arith.constant 0 : index
    %c0_10 = arith.constant 0 : index
    %c0_11 = arith.constant 0 : index
    %9 = vector.load %arg2[%c0_8, %c0_9, %c0_10, %c0_11] : memref<1x1x8x8xf32, #tpu.memory_space<vmem>>, vector<1x1x8x8xf32>
    %10 = vector.shape_cast %9 : vector<1x1x8x8xf32> to vector<1x8x8xf32>
    %cst_12 = arith.constant dense<0.000000e+00> : vector<1x8x8xf32>
    %11 = tpu.matmul %6, %8, %cst_12 {dimension_numbers = #tpu.dot_dimension_numbers<[2], [2], [1], [1], [0, 0, 0, 1, 1, 1], [0], [0]>} : vector<1x8x8xf32>, vector<1x8x8xf32>, vector<1x8x8xf32> -> vector<1x8x8xf32>
    %cst_13 = arith.constant dense<0xFF800000> : vector<1x8xf32>
    %12 = vector.multi_reduction <maximumf>, %11, %cst_13 [2] : vector<1x8x8xf32> to vector<1x8xf32>
    %13 = vector.shape_cast %12 : vector<1x8xf32> to vector<1x8x1xf32>
    %14 = vector.broadcast %13 : vector<1x8x1xf32> to vector<1x8x8xf32>
    %15 = arith.subf %11, %14 : vector<1x8x8xf32>
    %16 = math.exp %15 : vector<1x8x8xf32>
    %cst_14 = arith.constant dense<0.000000e+00> : vector<1x8xf32>
    %17 = vector.multi_reduction <add>, %16, %cst_14 [2] : vector<1x8x8xf32> to vector<1x8xf32>
    %18 = vector.shape_cast %17 : vector<1x8xf32> to vector<1x8x1xf32>
    %cst_15 = arith.constant dense<0.000000e+00> : vector<1x8x8xf32>
    %19 = tpu.matmul %16, %10, %cst_15 {dimension_numbers = #tpu.dot_dimension_numbers<[2], [1], [1], [2], [0, 0, 0, 1, 1, 2], [0], [0]>} : vector<1x8x8xf32>, vector<1x8x8xf32>, vector<1x8x8xf32> -> vector<1x8x8xf32>
    %20 = tpu.reciprocal %18 {approx = true} : vector<1x8x1xf32> -> vector<1x8x1xf32>
    %21 = vector.broadcast %20 : vector<1x8x1xf32> to vector<1x8x8xf32>
    %22 = arith.mulf %19, %21 : vector<1x8x8xf32>
    %c0_16 = arith.constant 0 : index
    %c0_17 = arith.constant 0 : index
    %23 = vector.load %arg17[%c0_16, %c0_17] : memref<8x32xf32, #tpu.memory_space<vmem>>, vector<8x32xf32>
    %24 = vector.shape_cast %22 : vector<1x8x8xf32> to vector<8x8xf32>
    %c0_18 = arith.constant 0 : index
    %c0_19 = arith.constant 0 : index
    %25 = vector.load %arg6[%c0_18, %c0_19] : memref<8x32xf32, #tpu.memory_space<vmem>>, vector<8x32xf32>
    %cst_20 = arith.constant dense<0.000000e+00> : vector<8x32xf32>
    %26 = tpu.matmul %24, %25, %cst_20 {dimension_numbers = #tpu.dot_dimension_numbers<[1], [0], [0], [1], [0, 0, 1, 1], [], []>} : vector<8x8xf32>, vector<8x32xf32>, vector<8x32xf32> -> vector<8x32xf32>
    %27 = arith.addf %23, %26 : vector<8x32xf32>
    %c0_21 = arith.constant 0 : index
    %c0_22 = arith.constant 0 : index
    %28 = vector.load %arg17[%c0_21, %c0_22] : memref<8x32xf32, #tpu.memory_space<vmem>>, vector<8x32xf32>
    tpu.vector_store %arg17[%c0_21, %c0_22], %27 {strides = array<i32>} : memref<8x32xf32, #tpu.memory_space<vmem>>, vector<8x32xf32>,
    %c3_i32 = arith.constant 3 : i32
    %29 = arith.cmpi eq, %arg1, %c3_i32 : i32
    %30 = arith.extui %29 : i1 to i32
    %c0_i32_23 = arith.constant 0 : i32
    %31 = arith.cmpi ne, %30, %c0_i32_23 : i32
    scf.if %31 {
      %c0_24 = arith.constant 0 : index
      %c0_25 = arith.constant 0 : index
      %32 = vector.load %arg17[%c0_24, %c0_25] : memref<8x32xf32, #tpu.memory_space<vmem>>, vector<8x32xf32>
      %c0_26 = arith.constant 0 : index
      %c0_27 = arith.constant 0 : index
      %33 = vector.load %arg7[%c0_26, %c0_27] : memref<1x32xf32, #tpu.memory_space<vmem>>, vector<1x32xf32>
      %34 = vector.broadcast %33 : vector<1x32xf32> to vector<8x32xf32>
      %35 = arith.addf %32, %34 : vector<8x32xf32>
      %c0_28 = arith.constant 0 : index
      %c0_29 = arith.constant 0 : index
      %c0_30 = arith.constant 0 : index
      %36 = vector.load %arg5[%c0_28, %c0_29, %c0_30] : memref<1x8x32xf32, #tpu.memory_space<vmem>>, vector<1x8x32xf32>
      %37 = vector.shape_cast %36 : vector<1x8x32xf32> to vector<8x32xf32>
      %38 = arith.addf %35, %37 : vector<8x32xf32>
      %c0_31 = arith.constant 0 : index
      %c0_32 = arith.constant 0 : index
      %39 = vector.load %arg8[%c0_31, %c0_32] : memref<1x32xf32, #tpu.memory_space<vmem>>, vector<1x32xf32>
      %c0_33 = arith.constant 0 : index
      %c0_34 = arith.constant 0 : index
      %40 = vector.load %arg9[%c0_33, %c0_34] : memref<1x32xf32, #tpu.memory_space<vmem>>, vector<1x32xf32>
      %cst_35 = arith.constant dense<0.000000e+00> : vector<8xf32>
      %41 = vector.multi_reduction <add>, %38, %cst_35 [1] : vector<8x32xf32> to vector<8xf32>
      %42 = vector.shape_cast %41 : vector<8xf32> to vector<8x1xf32>
      %cst_36 = arith.constant 3.200000e+01 : f32
      %43 = vector.broadcast %cst_36 : f32 to vector<8x1xf32>
      %44 = arith.divf %42, %43 : vector<8x1xf32>
      %45 = vector.broadcast %44 : vector<8x1xf32> to vector<8x32xf32>
      %46 = arith.subf %38, %45 : vector<8x32xf32>
      %47 = arith.mulf %46, %46 : vector<8x32xf32>
      %cst_37 = arith.constant dense<0.000000e+00> : vector<8xf32>
      %48 = vector.multi_reduction <add>, %47, %cst_37 [1] : vector<8x32xf32> to vector<8xf32>
      %49 = vector.shape_cast %48 : vector<8xf32> to vector<8x1xf32>
      %cst_38 = arith.constant 3.200000e+01 : f32
      %50 = vector.broadcast %cst_38 : f32 to vector<8x1xf32>
      %51 = arith.divf %49, %50 : vector<8x1xf32>
      %52 = vector.broadcast %44 : vector<8x1xf32> to vector<8x32xf32>
      %53 = arith.subf %38, %52 : vector<8x32xf32>
      %cst_39 = arith.constant 9.99999974E-6 : f32
      %54 = vector.broadcast %cst_39 : f32 to vector<8x1xf32>
      %55 = arith.addf %51, %54 : vector<8x1xf32>
      %56 = math.rsqrt %55 : vector<8x1xf32>
      %57 = vector.broadcast %56 : vector<8x1xf32> to vector<8x32xf32>
      %58 = arith.mulf %53, %57 : vector<8x32xf32>
      %59 = vector.broadcast %39 : vector<1x32xf32> to vector<8x32xf32>
      %60 = arith.mulf %58, %59 : vector<8x32xf32>
      %61 = vector.broadcast %40 : vector<1x32xf32> to vector<8x32xf32>
      %62 = arith.addf %60, %61 : vector<8x32xf32>
      %c0_40 = arith.constant 0 : index
      %c0_41 = arith.constant 0 : index
      %63 = vector.load %arg10[%c0_40, %c0_41] : memref<32x128xf32, #tpu.memory_space<vmem>>, vector<32x128xf32>
      %cst_42 = arith.constant dense<0.000000e+00> : vector<8x128xf32>
      %64 = tpu.matmul %62, %63, %cst_42 {dimension_numbers = #tpu.dot_dimension_numbers<[1], [0], [0], [1], [0, 0, 1, 1], [], []>} : vector<8x32xf32>, vector<32x128xf32>, vector<8x128xf32> -> vector<8x128xf32>
      %c0_43 = arith.constant 0 : index
      %c0_44 = arith.constant 0 : index
      %65 = vector.load %arg11[%c0_43, %c0_44] : memref<1x128xf32, #tpu.memory_space<vmem>>, vector<1x128xf32>
      %66 = vector.broadcast %65 : vector<1x128xf32> to vector<8x128xf32>
      %67 = arith.addf %64, %66 : vector<8x128xf32>
      %cst_45 = arith.constant 0.000000e+00 : f32
      %68 = vector.broadcast %cst_45 : f32 to vector<8x128xf32>
      %69 = arith.maximumf %67, %68 : vector<8x128xf32>
      %c0_46 = arith.constant 0 : index
      %c0_47 = arith.constant 0 : index
      %70 = vector.load %arg12[%c0_46, %c0_47] : memref<128x32xf32, #tpu.memory_space<vmem>>, vector<128x32xf32>
      %cst_48 = arith.constant dense<0.000000e+00> : vector<8x32xf32>
      %71 = tpu.matmul %69, %70, %cst_48 {dimension_numbers = #tpu.dot_dimension_numbers<[1], [0], [0], [1], [0, 0, 1, 1], [], []>} : vector<8x128xf32>, vector<128x32xf32>, vector<8x32xf32> -> vector<8x32xf32>
      %c0_49 = arith.constant 0 : index
      %c0_50 = arith.constant 0 : index
      %72 = vector.load %arg13[%c0_49, %c0_50] : memref<1x32xf32, #tpu.memory_space<vmem>>, vector<1x32xf32>
      %73 = vector.broadcast %72 : vector<1x32xf32> to vector<8x32xf32>
      %74 = arith.addf %71, %73 : vector<8x32xf32>
      %75 = arith.addf %74, %62 : vector<8x32xf32>
      %c0_51 = arith.constant 0 : index
      %c0_52 = arith.constant 0 : index
      %76 = vector.load %arg14[%c0_51, %c0_52] : memref<1x32xf32, #tpu.memory_space<vmem>>, vector<1x32xf32>
      %c0_53 = arith.constant 0 : index
      %c0_54 = arith.constant 0 : index
      %77 = vector.load %arg15[%c0_53, %c0_54] : memref<1x32xf32, #tpu.memory_space<vmem>>, vector<1x32xf32>
      %cst_55 = arith.constant dense<0.000000e+00> : vector<8xf32>
      %78 = vector.multi_reduction <add>, %75, %cst_55 [1] : vector<8x32xf32> to vector<8xf32>
      %79 = vector.shape_cast %78 : vector<8xf32> to vector<8x1xf32>
      %cst_56 = arith.constant 3.200000e+01 : f32
      %80 = vector.broadcast %cst_56 : f32 to vector<8x1xf32>
      %81 = arith.divf %79, %80 : vector<8x1xf32>
      %82 = vector.broadcast %81 : vector<8x1xf32> to vector<8x32xf32>
      %83 = arith.subf %75, %82 : vector<8x32xf32>
      %84 = arith.mulf %83, %83 : vector<8x32xf32>
      %cst_57 = arith.constant dense<0.000000e+00> : vector<8xf32>
      %85 = vector.multi_reduction <add>, %84, %cst_57 [1] : vector<8x32xf32> to vector<8xf32>
      %86 = vector.shape_cast %85 : vector<8xf32> to vector<8x1xf32>
      %cst_58 = arith.constant 3.200000e+01 : f32
      %87 = vector.broadcast %cst_58 : f32 to vector<8x1xf32>
      %88 = arith.divf %86, %87 : vector<8x1xf32>
      %89 = vector.broadcast %81 : vector<8x1xf32> to vector<8x32xf32>
      %90 = arith.subf %75, %89 : vector<8x32xf32>
      %cst_59 = arith.constant 9.99999974E-6 : f32
      %91 = vector.broadcast %cst_59 : f32 to vector<8x1xf32>
      %92 = arith.addf %88, %91 : vector<8x1xf32>
      %93 = math.rsqrt %92 : vector<8x1xf32>
      %94 = vector.broadcast %93 : vector<8x1xf32> to vector<8x32xf32>
      %95 = arith.mulf %90, %94 : vector<8x32xf32>
      %96 = vector.broadcast %76 : vector<1x32xf32> to vector<8x32xf32>
      %97 = arith.mulf %95, %96 : vector<8x32xf32>
      %98 = vector.broadcast %77 : vector<1x32xf32> to vector<8x32xf32>
      %99 = arith.addf %97, %98 : vector<8x32xf32>
      %100 = vector.shape_cast %99 : vector<8x32xf32> to vector<1x8x32xf32>
      %c0_60 = arith.constant 0 : index
      %c0_61 = arith.constant 0 : index
      %c0_62 = arith.constant 0 : index
      %101 = vector.load %arg16[%c0_60, %c0_61, %c0_62] : memref<1x8x32xf32, #tpu.memory_space<vmem>>, vector<1x8x32xf32>
      tpu.vector_store %arg16[%c0_60, %c0_61, %c0_62], %100 {strides = array<i32>} : memref<1x8x32xf32, #tpu.memory_space<vmem>>, vector<1x8x32xf32>,
    } else {
    }
    return
  }
  func.func @transform_0(%arg0: i32, %arg1: i32) -> (i32, i32, i32, i32) {
    %c0_i32 = arith.constant 0 : i32
    %c0_i32_0 = arith.constant 0 : i32
    %c0_i32_1 = arith.constant 0 : i32
    return %arg0, %arg1, %c0_i32, %c0_i32_0 : i32, i32, i32, i32
  }
  func.func @transform_1(%arg0: i32, %arg1: i32) -> (i32, i32, i32, i32) {
    %c0_i32 = arith.constant 0 : i32
    %c0_i32_0 = arith.constant 0 : i32
    %c0_i32_1 = arith.constant 0 : i32
    return %arg0, %arg1, %c0_i32, %c0_i32_0 : i32, i32, i32, i32
  }
  func.func @transform_2(%arg0: i32, %arg1: i32) -> (i32, i32, i32, i32) {
    %c0_i32 = arith.constant 0 : i32
    %c0_i32_0 = arith.constant 0 : i32
    %c0_i32_1 = arith.constant 0 : i32
    return %arg0, %arg1, %c0_i32, %c0_i32_0 : i32, i32, i32, i32
  }
  func.func @transform_3(%arg0: i32, %arg1: i32) -> (i32, i32, i32) {
    %c0_i32 = arith.constant 0 : i32
    %c0_i32_0 = arith.constant 0 : i32
    %c0_i32_1 = arith.constant 0 : i32
    return %arg0, %c0_i32, %c0_i32_0 : i32, i32, i32
  }
  func.func @transform_4(%arg0: i32, %arg1: i32) -> (i32, i32) {
    %c0_i32 = arith.constant 0 : i32
    %c0_i32_0 = arith.constant 0 : i32
    return %arg1, %c0_i32 : i32, i32
  }
  func.func @transform_5(%arg0: i32, %arg1: i32) -> (i32, i32) {
    %c0_i32 = arith.constant 0 : i32
    %c0_i32_0 = arith.constant 0 : i32
    %c0_i32_1 = arith.constant 0 : i32
    return %c0_i32, %c0_i32_0 : i32, i32
  }
  func.func @transform_6(%arg0: i32, %arg1: i32) -> (i32, i32) {
    %c0_i32 = arith.constant 0 : i32
    %c0_i32_0 = arith.constant 0 : i32
    %c0_i32_1 = arith.constant 0 : i32
    return %c0_i32, %c0_i32_0 : i32, i32
  }
  func.func @transform_7(%arg0: i32, %arg1: i32) -> (i32, i32) {
    %c0_i32 = arith.constant 0 : i32
    %c0_i32_0 = arith.constant 0 : i32
    %c0_i32_1 = arith.constant 0 : i32
    return %c0_i32, %c0_i32_0 : i32, i32
  }
  func.func @transform_8(%arg0: i32, %arg1: i32) -> (i32, i32) {
    %c0_i32 = arith.constant 0 : i32
    %c0_i32_0 = arith.constant 0 : i32
    %c0_i32_1 = arith.constant 0 : i32
    return %c0_i32, %c0_i32_0 : i32, i32
  }
  func.func @transform_9(%arg0: i32, %arg1: i32) -> (i32, i32) {
    %c0_i32 = arith.constant 0 : i32
    %c0_i32_0 = arith.constant 0 : i32
    %c0_i32_1 = arith.constant 0 : i32
    return %c0_i32, %c0_i32_0 : i32, i32
  }
  func.func @transform_10(%arg0: i32, %arg1: i32) -> (i32, i32) {
    %c0_i32 = arith.constant 0 : i32
    %c0_i32_0 = arith.constant 0 : i32
    %c0_i32_1 = arith.constant 0 : i32
    return %c0_i32, %c0_i32_0 : i32, i32
  }
  func.func @transform_11(%arg0: i32, %arg1: i32) -> (i32, i32) {
    %c0_i32 = arith.constant 0 : i32
    %c0_i32_0 = arith.constant 0 : i32
    %c0_i32_1 = arith.constant 0 : i32
    return %c0_i32, %c0_i32_0 : i32, i32
  }
  func.func @transform_12(%arg0: i32, %arg1: i32) -> (i32, i32) {
    %c0_i32 = arith.constant 0 : i32
    %c0_i32_0 = arith.constant 0 : i32
    %c0_i32_1 = arith.constant 0 : i32
    return %c0_i32, %c0_i32_0 : i32, i32
  }
  func.func @transform_13(%arg0: i32, %arg1: i32) -> (i32, i32) {
    %c0_i32 = arith.constant 0 : i32
    %c0_i32_0 = arith.constant 0 : i32
    %c0_i32_1 = arith.constant 0 : i32
    return %c0_i32, %c0_i32_0 : i32, i32
  }
  func.func @transform_14(%arg0: i32, %arg1: i32) -> (i32, i32, i32) {
    %c0_i32 = arith.constant 0 : i32
    %c0_i32_0 = arith.constant 0 : i32
    %c0_i32_1 = arith.constant 0 : i32
    return %arg0, %c0_i32, %c0_i32_0 : i32, i32, i32
  }
}

module attributes {stable_mosaic.version = 11 : i64} {
  func.func @_transformer_block_kernel(%arg0: i32, %arg1: i32, %arg2: memref<1x1x8x8xf32, #tpu.memory_space<vmem>>, %arg3: memref<1x1x8x8xf32, #tpu.memory_space<vmem>>, %arg4: memref<1x1x8x8xf32, #tpu.memory_space<vmem>>, %arg5: memref<1x8x32xf32, #tpu.memory_space<vmem>>, %arg6: memref<8x32xf32, #tpu.memory_space<vmem>>, %arg7: memref<1x32xf32, #tpu.memory_space<vmem>>, %arg8: memref<1x32xf32, #tpu.memory_space<vmem>>, %arg9: memref<1x32xf32, #tpu.memory_space<vmem>>, %arg10: memref<32x128xf32, #tpu.memory_space<vmem>>, %arg11: memref<1x128xf32, #tpu.memory_space<vmem>>, %arg12: memref<128x32xf32, #tpu.memory_space<vmem>>, %arg13: memref<1x32xf32, #tpu.memory_space<vmem>>, %arg14: memref<1x32xf32, #tpu.memory_space<vmem>>, %arg15: memref<1x32xf32, #tpu.memory_space<vmem>>, %arg16: memref<1x8x32xf32, #tpu.memory_space<vmem>>, %arg17: memref<8x32xf32, #tpu.memory_space<vmem>>) attributes {dimension_semantics = [#tpu.dimension_semantics<parallel>, #tpu.dimension_semantics<arbitrary>], iteration_bounds = array<i64: 2, 4>, scalar_prefetch = 0 : i64, scratch_operands = 1 : i64, tpu.core_type = #tpu.core_type<tc>, window_params = [{transform_indices = @transform_0, window_bounds = array<i64: 1, 1, 8, 8>}, {transform_indices = @transform_1, window_bounds = array<i64: 1, 1, 8, 8>}, {transform_indices = @transform_2, window_bounds = array<i64: 1, 1, 8, 8>}, {transform_indices = @transform_3, window_bounds = array<i64: 1, 8, 32>}, {transform_indices = @transform_4, window_bounds = array<i64: 8, 32>}, {pipeline_mode = #tpu.pipeline_mode<synchronous>, transform_indices = @transform_5, window_bounds = array<i64: 1, 32>}, {pipeline_mode = #tpu.pipeline_mode<synchronous>, transform_indices = @transform_6, window_bounds = array<i64: 1, 32>}, {pipeline_mode = #tpu.pipeline_mode<synchronous>, transform_indices = @transform_7, window_bounds = array<i64: 1, 32>}, {pipeline_mode = #tpu.pipeline_mode<synchronous>, transform_indices = @transform_8, window_bounds = array<i64: 32, 128>}, {pipeline_mode = #tpu.pipeline_mode<synchronous>, transform_indices = @transform_9, window_bounds = array<i64: 1, 128>}, {pipeline_mode = #tpu.pipeline_mode<synchronous>, transform_indices = @transform_10, window_bounds = array<i64: 128, 32>}, {pipeline_mode = #tpu.pipeline_mode<synchronous>, transform_indices = @transform_11, window_bounds = array<i64: 1, 32>}, {pipeline_mode = #tpu.pipeline_mode<synchronous>, transform_indices = @transform_12, window_bounds = array<i64: 1, 32>}, {pipeline_mode = #tpu.pipeline_mode<synchronous>, transform_indices = @transform_13, window_bounds = array<i64: 1, 32>}, {transform_indices = @transform_14, window_bounds = array<i64: 1, 8, 32>}]} {
    %c0_i32 = arith.constant 0 : i32
    %0 = arith.cmpi eq, %arg1, %c0_i32 : i32
    %1 = arith.extui %0 : i1 to i32
    %c0_i32_0 = arith.constant 0 : i32
    %2 = arith.cmpi ne, %1, %c0_i32_0 : i32
    scf.if %2 {
      %cst_24 = arith.constant 0.000000e+00 : f32
      %32 = vector.broadcast %cst_24 : f32 to vector<8x32xf32>
      %c0_25 = arith.constant 0 : index
      %c0_26 = arith.constant 0 : index
      %33 = vector.load %arg17[%c0_25, %c0_26] : memref<8x32xf32, #tpu.memory_space<vmem>>, vector<8x32xf32>
      tpu.vector_store %arg17[%c0_25, %c0_26], %32 {strides = array<i32>} : memref<8x32xf32, #tpu.memory_space<vmem>>, vector<8x32xf32>,
    } else {
    }
    %c0 = arith.constant 0 : index
    %c0_1 = arith.constant 0 : index
    %c0_2 = arith.constant 0 : index
    %c0_3 = arith.constant 0 : index
    %3 = vector.load %arg4[%c0, %c0_1, %c0_2, %c0_3] : memref<1x1x8x8xf32, #tpu.memory_space<vmem>>, vector<1x1x8x8xf32>
    %4 = vector.shape_cast %3 : vector<1x1x8x8xf32> to vector<1x8x8xf32>
    %cst = arith.constant 0.176776692 : f32
    %5 = vector.broadcast %cst : f32 to vector<1x8x8xf32>
    %6 = arith.mulf %4, %5 : vector<1x8x8xf32>
    %c0_4 = arith.constant 0 : index
    %c0_5 = arith.constant 0 : index
    %c0_6 = arith.constant 0 : index
    %c0_7 = arith.constant 0 : index
    %7 = vector.load %arg3[%c0_4, %c0_5, %c0_6, %c0_7] : memref<1x1x8x8xf32, #tpu.memory_space<vmem>>, vector<1x1x8x8xf32>
    %8 = vector.shape_cast %7 : vector<1x1x8x8xf32> to vector<1x8x8xf32>
    %c0_8 = arith.constant 0 : index
    %c0_9 = arith.constant 0 : index
    %c0_10 = arith.constant 0 : index
    %c0_11 = arith.constant 0 : index
    %9 = vector.load %arg2[%c0_8, %c0_9, %c0_10, %c0_11] : memref<1x1x8x8xf32, #tpu.memory_space<vmem>>, vector<1x1x8x8xf32>
    %10 = vector.shape_cast %9 : vector<1x1x8x8xf32> to vector<1x8x8xf32>
    %cst_12 = arith.constant dense<0.000000e+00> : vector<1x8x8xf32>
    %11 = tpu.matmul %6, %8, %cst_12 {dimension_numbers = #tpu.dot_dimension_numbers<[2], [2], [1], [1], [0, 0, 0, 1, 1, 1], [0], [0]>} : vector<1x8x8xf32>, vector<1x8x8xf32>, vector<1x8x8xf32> -> vector<1x8x8xf32>
    %cst_13 = arith.constant dense<0xFF800000> : vector<1x8xf32>
    %12 = vector.multi_reduction <maximumf>, %11, %cst_13 [2] : vector<1x8x8xf32> to vector<1x8xf32>
    %13 = vector.shape_cast %12 : vector<1x8xf32> to vector<1x8x1xf32>
    %14 = vector.broadcast %13 : vector<1x8x1xf32> to vector<1x8x8xf32>
    %15 = arith.subf %11, %14 : vector<1x8x8xf32>
    %16 = math.exp %15 : vector<1x8x8xf32>
    %cst_14 = arith.constant dense<0.000000e+00> : vector<1x8xf32>
    %17 = vector.multi_reduction <add>, %16, %cst_14 [2] : vector<1x8x8xf32> to vector<1x8xf32>
    %18 = vector.shape_cast %17 : vector<1x8xf32> to vector<1x8x1xf32>
    %cst_15 = arith.constant dense<0.000000e+00> : vector<1x8x8xf32>
    %19 = tpu.matmul %16, %10, %cst_15 {dimension_numbers = #tpu.dot_dimension_numbers<[2], [1], [1], [2], [0, 0, 0, 1, 1, 2], [0], [0]>} : vector<1x8x8xf32>, vector<1x8x8xf32>, vector<1x8x8xf32> -> vector<1x8x8xf32>
    %20 = tpu.reciprocal %18 {approx = true} : vector<1x8x1xf32> -> vector<1x8x1xf32>
    %21 = vector.broadcast %20 : vector<1x8x1xf32> to vector<1x8x8xf32>
    %22 = arith.mulf %19, %21 : vector<1x8x8xf32>
    %c0_16 = arith.constant 0 : index
    %c0_17 = arith.constant 0 : index
    %23 = vector.load %arg17[%c0_16, %c0_17] : memref<8x32xf32, #tpu.memory_space<vmem>>, vector<8x32xf32>
    %24 = vector.shape_cast %22 : vector<1x8x8xf32> to vector<8x8xf32>
    %c0_18 = arith.constant 0 : index
    %c0_19 = arith.constant 0 : index
    %25 = vector.load %arg6[%c0_18, %c0_19] : memref<8x32xf32, #tpu.memory_space<vmem>>, vector<8x32xf32>
    %cst_20 = arith.constant dense<0.000000e+00> : vector<8x32xf32>
    %26 = tpu.matmul %24, %25, %cst_20 {dimension_numbers = #tpu.dot_dimension_numbers<[1], [0], [0], [1], [0, 0, 1, 1], [], []>} : vector<8x8xf32>, vector<8x32xf32>, vector<8x32xf32> -> vector<8x32xf32>
    %27 = arith.addf %23, %26 : vector<8x32xf32>
    %c0_21 = arith.constant 0 : index
    %c0_22 = arith.constant 0 : index
    %28 = vector.load %arg17[%c0_21, %c0_22] : memref<8x32xf32, #tpu.memory_space<vmem>>, vector<8x32xf32>
    tpu.vector_store %arg17[%c0_21, %c0_22], %27 {strides = array<i32>} : memref<8x32xf32, #tpu.memory_space<vmem>>, vector<8x32xf32>,
    %c3_i32 = arith.constant 3 : i32
    %29 = arith.cmpi eq, %arg1, %c3_i32 : i32
    %30 = arith.extui %29 : i1 to i32
    %c0_i32_23 = arith.constant 0 : i32
    %31 = arith.cmpi ne, %30, %c0_i32_23 : i32
    scf.if %31 {
      %c0_24 = arith.constant 0 : index
      %c0_25 = arith.constant 0 : index
      %32 = vector.load %arg17[%c0_24, %c0_25] : memref<8x32xf32, #tpu.memory_space<vmem>>, vector<8x32xf32>
      %c0_26 = arith.constant 0 : index
      %c0_27 = arith.constant 0 : index
      %33 = vector.load %arg7[%c0_26, %c0_27] : memref<1x32xf32, #tpu.memory_space<vmem>>, vector<1x32xf32>
      %34 = vector.broadcast %33 : vector<1x32xf32> to vector<8x32xf32>
      %35 = arith.addf %32, %34 : vector<8x32xf32>
      %c0_28 = arith.constant 0 : index
      %c0_29 = arith.constant 0 : index
      %c0_30 = arith.constant 0 : index
      %36 = vector.load %arg5[%c0_28, %c0_29, %c0_30] : memref<1x8x32xf32, #tpu.memory_space<vmem>>, vector<1x8x32xf32>
      %37 = vector.shape_cast %36 : vector<1x8x32xf32> to vector<8x32xf32>
      %38 = arith.addf %35, %37 : vector<8x32xf32>
      %c0_31 = arith.constant 0 : index
      %c0_32 = arith.constant 0 : index
      %39 = vector.load %arg8[%c0_31, %c0_32] : memref<1x32xf32, #tpu.memory_space<vmem>>, vector<1x32xf32>
      %c0_33 = arith.constant 0 : index
      %c0_34 = arith.constant 0 : index
      %40 = vector.load %arg9[%c0_33, %c0_34] : memref<1x32xf32, #tpu.memory_space<vmem>>, vector<1x32xf32>
      %cst_35 = arith.constant dense<0.000000e+00> : vector<8xf32>
      %41 = vector.multi_reduction <add>, %38, %cst_35 [1] : vector<8x32xf32> to vector<8xf32>
      %42 = vector.shape_cast %41 : vector<8xf32> to vector<8x1xf32>
      %cst_36 = arith.constant 3.200000e+01 : f32
      %43 = vector.broadcast %cst_36 : f32 to vector<8x1xf32>
      %44 = arith.divf %42, %43 : vector<8x1xf32>
      %45 = vector.broadcast %44 : vector<8x1xf32> to vector<8x32xf32>
      %46 = arith.subf %38, %45 : vector<8x32xf32>
      %47 = arith.mulf %46, %46 : vector<8x32xf32>
      %cst_37 = arith.constant dense<0.000000e+00> : vector<8xf32>
      %48 = vector.multi_reduction <add>, %47, %cst_37 [1] : vector<8x32xf32> to vector<8xf32>
      %49 = vector.shape_cast %48 : vector<8xf32> to vector<8x1xf32>
      %cst_38 = arith.constant 3.200000e+01 : f32
      %50 = vector.broadcast %cst_38 : f32 to vector<8x1xf32>
      %51 = arith.divf %49, %50 : vector<8x1xf32>
      %52 = vector.broadcast %44 : vector<8x1xf32> to vector<8x32xf32>
      %53 = arith.subf %38, %52 : vector<8x32xf32>
      %cst_39 = arith.constant 9.99999974E-6 : f32
      %54 = vector.broadcast %cst_39 : f32 to vector<8x1xf32>
      %55 = arith.addf %51, %54 : vector<8x1xf32>
      %56 = math.rsqrt %55 : vector<8x1xf32>
      %57 = vector.broadcast %56 : vector<8x1xf32> to vector<8x32xf32>
      %58 = arith.mulf %53, %57 : vector<8x32xf32>
      %59 = vector.broadcast %39 : vector<1x32xf32> to vector<8x32xf32>
      %60 = arith.mulf %58, %59 : vector<8x32xf32>
      %61 = vector.broadcast %40 : vector<1x32xf32> to vector<8x32xf32>
      %62 = arith.addf %60, %61 : vector<8x32xf32>
      %c0_40 = arith.constant 0 : index
      %c0_41 = arith.constant 0 : index
      %63 = vector.load %arg10[%c0_40, %c0_41] : memref<32x128xf32, #tpu.memory_space<vmem>>, vector<32x128xf32>
      %cst_42 = arith.constant dense<0.000000e+00> : vector<8x128xf32>
      %64 = tpu.matmul %62, %63, %cst_42 {dimension_numbers = #tpu.dot_dimension_numbers<[1], [0], [0], [1], [0, 0, 1, 1], [], []>} : vector<8x32xf32>, vector<32x128xf32>, vector<8x128xf32> -> vector<8x128xf32>
      %c0_43 = arith.constant 0 : index
      %c0_44 = arith.constant 0 : index
      %65 = vector.load %arg11[%c0_43, %c0_44] : memref<1x128xf32, #tpu.memory_space<vmem>>, vector<1x128xf32>
      %66 = vector.broadcast %65 : vector<1x128xf32> to vector<8x128xf32>
      %67 = arith.addf %64, %66 : vector<8x128xf32>
      %cst_45 = arith.constant 0.000000e+00 : f32
      %68 = vector.broadcast %cst_45 : f32 to vector<8x128xf32>
      %69 = arith.maximumf %67, %68 : vector<8x128xf32>
      %c0_46 = arith.constant 0 : index
      %c0_47 = arith.constant 0 : index
      %70 = vector.load %arg12[%c0_46, %c0_47] : memref<128x32xf32, #tpu.memory_space<vmem>>, vector<128x32xf32>
      %cst_48 = arith.constant dense<0.000000e+00> : vector<8x32xf32>
      %71 = tpu.matmul %69, %70, %cst_48 {dimension_numbers = #tpu.dot_dimension_numbers<[1], [0], [0], [1], [0, 0, 1, 1], [], []>} : vector<8x128xf32>, vector<128x32xf32>, vector<8x32xf32> -> vector<8x32xf32>
      %c0_49 = arith.constant 0 : index
      %c0_50 = arith.constant 0 : index
      %72 = vector.load %arg13[%c0_49, %c0_50] : memref<1x32xf32, #tpu.memory_space<vmem>>, vector<1x32xf32>
      %73 = vector.broadcast %72 : vector<1x32xf32> to vector<8x32xf32>
      %74 = arith.addf %71, %73 : vector<8x32xf32>
      %75 = arith.addf %74, %62 : vector<8x32xf32>
      %c0_51 = arith.constant 0 : index
      %c0_52 = arith.constant 0 : index
      %76 = vector.load %arg14[%c0_51, %c0_52] : memref<1x32xf32, #tpu.memory_space<vmem>>, vector<1x32xf32>
      %c0_53 = arith.constant 0 : index
      %c0_54 = arith.constant 0 : index
      %77 = vector.load %arg15[%c0_53, %c0_54] : memref<1x32xf32, #tpu.memory_space<vmem>>, vector<1x32xf32>
      %cst_55 = arith.constant dense<0.000000e+00> : vector<8xf32>
      %78 = vector.multi_reduction <add>, %75, %cst_55 [1] : vector<8x32xf32> to vector<8xf32>
      %79 = vector.shape_cast %78 : vector<8xf32> to vector<8x1xf32>
      %cst_56 = arith.constant 3.200000e+01 : f32
      %80 = vector.broadcast %cst_56 : f32 to vector<8x1xf32>
      %81 = arith.divf %79, %80 : vector<8x1xf32>
      %82 = vector.broadcast %81 : vector<8x1xf32> to vector<8x32xf32>
      %83 = arith.subf %75, %82 : vector<8x32xf32>
      %84 = arith.mulf %83, %83 : vector<8x32xf32>
      %cst_57 = arith.constant dense<0.000000e+00> : vector<8xf32>
      %85 = vector.multi_reduction <add>, %84, %cst_57 [1] : vector<8x32xf32> to vector<8xf32>
      %86 = vector.shape_cast %85 : vector<8xf32> to vector<8x1xf32>
      %cst_58 = arith.constant 3.200000e+01 : f32
      %87 = vector.broadcast %cst_58 : f32 to vector<8x1xf32>
      %88 = arith.divf %86, %87 : vector<8x1xf32>
      %89 = vector.broadcast %81 : vector<8x1xf32> to vector<8x32xf32>
      %90 = arith.subf %75, %89 : vector<8x32xf32>
      %cst_59 = arith.constant 9.99999974E-6 : f32
      %91 = vector.broadcast %cst_59 : f32 to vector<8x1xf32>
      %92 = arith.addf %88, %91 : vector<8x1xf32>
      %93 = math.rsqrt %92 : vector<8x1xf32>
      %94 = vector.broadcast %93 : vector<8x1xf32> to vector<8x32xf32>
      %95 = arith.mulf %90, %94 : vector<8x32xf32>
      %96 = vector.broadcast %76 : vector<1x32xf32> to vector<8x32xf32>
      %97 = arith.mulf %95, %96 : vector<8x32xf32>
      %98 = vector.broadcast %77 : vector<1x32xf32> to vector<8x32xf32>
      %99 = arith.addf %97, %98 : vector<8x32xf32>
      %100 = vector.shape_cast %99 : vector<8x32xf32> to vector<1x8x32xf32>
      %c0_60 = arith.constant 0 : index
      %c0_61 = arith.constant 0 : index
      %c0_62 = arith.constant 0 : index
      %101 = vector.load %arg16[%c0_60, %c0_61, %c0_62] : memref<1x8x32xf32, #tpu.memory_space<vmem>>, vector<1x8x32xf32>
      tpu.vector_store %arg16[%c0_60, %c0_61, %c0_62], %100 {strides = array<i32>} : memref<1x8x32xf32, #tpu.memory_space<vmem>>, vector<1x8x32xf32>,
    } else {
    }
    return
  }
  func.func @transform_0(%arg0: i32, %arg1: i32) -> (i32, i32, i32, i32) {
    %c0_i32 = arith.constant 0 : i32
    %c0_i32_0 = arith.constant 0 : i32
    %c0_i32_1 = arith.constant 0 : i32
    return %arg0, %arg1, %c0_i32, %c0_i32_0 : i32, i32, i32, i32
  }
  func.func @transform_1(%arg0: i32, %arg1: i32) -> (i32, i32, i32, i32) {
    %c0_i32 = arith.constant 0 : i32
    %c0_i32_0 = arith.constant 0 : i32
    %c0_i32_1 = arith.constant 0 : i32
    return %arg0, %arg1, %c0_i32, %c0_i32_0 : i32, i32, i32, i32
  }
  func.func @transform_2(%arg0: i32, %arg1: i32) -> (i32, i32, i32, i32) {
    %c0_i32 = arith.constant 0 : i32
    %c0_i32_0 = arith.constant 0 : i32
    %c0_i32_1 = arith.constant 0 : i32
    return %arg0, %arg1, %c0_i32, %c0_i32_0 : i32, i32, i32, i32
  }
  func.func @transform_3(%arg0: i32, %arg1: i32) -> (i32, i32, i32) {
    %c0_i32 = arith.constant 0 : i32
    %c0_i32_0 = arith.constant 0 : i32
    %c0_i32_1 = arith.constant 0 : i32
    return %arg0, %c0_i32, %c0_i32_0 : i32, i32, i32
  }
  func.func @transform_4(%arg0: i32, %arg1: i32) -> (i32, i32) {
    %c0_i32 = arith.constant 0 : i32
    %c0_i32_0 = arith.constant 0 : i32
    return %arg1, %c0_i32 : i32, i32
  }
  func.func @transform_5(%arg0: i32, %arg1: i32) -> (i32, i32) {
    %c0_i32 = arith.constant 0 : i32
    %c0_i32_0 = arith.constant 0 : i32
    %c0_i32_1 = arith.constant 0 : i32
    return %c0_i32, %c0_i32_0 : i32, i32
  }
  func.func @transform_6(%arg0: i32, %arg1: i32) -> (i32, i32) {
    %c0_i32 = arith.constant 0 : i32
    %c0_i32_0 = arith.constant 0 : i32
    %c0_i32_1 = arith.constant 0 : i32
    return %c0_i32, %c0_i32_0 : i32, i32
  }
  func.func @transform_7(%arg0: i32, %arg1: i32) -> (i32, i32) {
    %c0_i32 = arith.constant 0 : i32
    %c0_i32_0 = arith.constant 0 : i32
    %c0_i32_1 = arith.constant 0 : i32
    return %c0_i32, %c0_i32_0 : i32, i32
  }
  func.func @transform_8(%arg0: i32, %arg1: i32) -> (i32, i32) {
    %c0_i32 = arith.constant 0 : i32
    %c0_i32_0 = arith.constant 0 : i32
    %c0_i32_1 = arith.constant 0 : i32
    return %c0_i32, %c0_i32_0 : i32, i32
  }
  func.func @transform_9(%arg0: i32, %arg1: i32) -> (i32, i32) {
    %c0_i32 = arith.constant 0 : i32
    %c0_i32_0 = arith.constant 0 : i32
    %c0_i32_1 = arith.constant 0 : i32
    return %c0_i32, %c0_i32_0 : i32, i32
  }
  func.func @transform_10(%arg0: i32, %arg1: i32) -> (i32, i32) {
    %c0_i32 = arith.constant 0 : i32
    %c0_i32_0 = arith.constant 0 : i32
    %c0_i32_1 = arith.constant 0 : i32
    return %c0_i32, %c0_i32_0 : i32, i32
  }
  func.func @transform_11(%arg0: i32, %arg1: i32) -> (i32, i32) {
    %c0_i32 = arith.constant 0 : i32
    %c0_i32_0 = arith.constant 0 : i32
    %c0_i32_1 = arith.constant 0 : i32
    return %c0_i32, %c0_i32_0 : i32, i32
  }
  func.func @transform_12(%arg0: i32, %arg1: i32) -> (i32, i32) {
    %c0_i32 = arith.constant 0 : i32
    %c0_i32_0 = arith.constant 0 : i32
    %c0_i32_1 = arith.constant 0 : i32
    return %c0_i32, %c0_i32_0 : i32, i32
  }
  func.func @transform_13(%arg0: i32, %arg1: i32) -> (i32, i32) {
    %c0_i32 = arith.constant 0 : i32
    %c0_i32_0 = arith.constant 0 : i32
    %c0_i32_1 = arith.constant 0 : i32
    return %c0_i32, %c0_i32_0 : i32, i32
  }
  func.func @transform_14(%arg0: i32, %arg1: i32) -> (i32, i32, i32) {
    %c0_i32 = arith.constant 0 : i32
    %c0_i32_0 = arith.constant 0 : i32
    %c0_i32_1 = arith.constant 0 : i32
    return %arg0, %c0_i32, %c0_i32_0 : i32, i32, i32
  }
}

</mosaic_0001>

<llo_original>
// kernel: tpu_custom_call.1
$region0: #{tpu_custom_call.1}
  #allocation0 [shape = 'u32[]', space=smem, size = 0x4, offset = 0x4, fixed_abs, tag = 'smem constant byte address 0x4 - core index']
  #allocation1 [shape = 'u32[144,128]{1,0:T(1,128)}', space=vmem, size = 0x12000, scoped, tag = 'internal scratch']
  #allocation2 [shape = 'f32[8,32]{1,0:T(8,128)}', space=vmem, size = 0x1000, scoped, tag = 'scratch operand']
  %s0 = inlined_call_operand.vmem [shape: f32[2,4,8,8], index: 0, kind: input, shape index: {}]
  %s1 = inlined_call_operand.vmem [shape: f32[2,4,8,8], index: 1, kind: input, shape index: {}]
  %s2 = inlined_call_operand.hbm [shape: f32[2,4,8,8], index: 2, kind: input, shape index: {}]
  %s3 = inlined_call_operand.hbm [shape: f32[2,8,32], index: 3, kind: input, shape index: {}]
  %s4 = inlined_call_operand.vmem [shape: f32[32,32], index: 4, kind: input, shape index: {}]
  %s5 = inlined_call_operand.vmem [shape: f32[1,32], index: 5, kind: input, shape index: {}]
  %s6 = inlined_call_operand.vmem [shape: f32[1,32], index: 6, kind: input, shape index: {}]
  %s7 = inlined_call_operand.vmem [shape: f32[1,32], index: 7, kind: input, shape index: {}]
  %s8 = inlined_call_operand.hbm [shape: f32[32,128], index: 8, kind: input, shape index: {}]
  %s9 = inlined_call_operand.vmem [shape: f32[1,128], index: 9, kind: input, shape index: {}]
  %s10 = inlined_call_operand.vmem [shape: f32[128,32], index: 10, kind: input, shape index: {}]
  %s11 = inlined_call_operand.vmem [shape: f32[1,32], index: 11, kind: input, shape index: {}]
  %s12 = inlined_call_operand.vmem [shape: f32[1,32], index: 12, kind: input, shape index: {}]
  %s13 = inlined_call_operand.vmem [shape: f32[1,32], index: 13, kind: input, shape index: {}]
  %s14 = inlined_call_operand.hbm [shape: f32[2,8,32], index: 14, kind: output, shape index: {}]
  %s15 = sld [smem:[#allocation0]]
  $region109: #{tpu_custom_call.1} parent=0
    _
  %s17 = ssub.s32 1, %s15
  %s18 = scalar_select 0, %s17, %s15
  $region1: #{tpu_custom_call.1} parent=0
    #allocation3 [shape = 'u8[8192]{0}', space=vmem, size = 0x2000, scoped, tag = 'input window, operand 2']
    #allocation4 [shape = 's32[2]{0}', space=sflag, size = 0x8, scoped, tag = 'scoped memory for tpu_custom_call.1']
    #allocation5 [shape = 's32[2]{0}', space=sflag, size = 0x8, scoped, tag = 'scoped memory for tpu_custom_call.1']
    #allocation6 [shape = 'u8[8192]{0}', space=vmem, size = 0x2000, scoped, tag = 'input window, operand 3']
    #allocation7 [shape = 's32[2]{0}', space=sflag, size = 0x8, scoped, tag = 'scoped memory for tpu_custom_call.1']
    #allocation8 [shape = 'u8[16384]{0}', space=vmem, size = 0x4000, scoped, tag = 'input window, operand 8, single buffered']
    #allocation9 [shape = 'u8[8192]{0}', space=vmem, size = 0x2000, scoped, tag = 'output window, operand 0']
    %19 = vsyncpa [#allocation4], 0
    %s20 = scalar_lea.sflag [#allocation4], 1
    %21 = vsyncpa %s20, 0
    %22 = vsyncpa [#allocation7], 0
    %s23 = scalar_lea.sflag [#allocation7], 1
    %24 = vsyncpa %s23, 0
    %25 = vsyncpa [#allocation5], 0
    %s26 = scalar_lea.sflag [#allocation5], 1
    %27 = vsyncpa %s26, 0
    loop: start=0, step=1, limit=10
    $region2: #{tpu_custom_call.1} parent=1 // loop_pre_header
      _
    $region3: #{tpu_custom_call.1} parent=1 // loop_header
      %s29 = sphi 0, %s33
      %p30 = scmp.ge.s32.totalorder %s29, 10
      %s36 = sphi 0, %s48
      %s37 = sphi 0, %s44
      %s38 = sphi 0, %s36
      %s39 = sphi 0, %s37
      %s40 = sphi 0, %s38
      %s41 = sphi 0, %s39
      %s53 = sphi 0, %s55
      %s56 = sphi 0, %s53
      %s57 = sphi 0, %s56
      %s73 = sphi 0, %s57
      %s81 = sphi 0, %s83
      %s84 = sphi 0, %s81
      %s85 = sphi 0, %s84
      %s101 = sphi 0, %s85
      %s109 = sphi 0, %s111
      %s112 = sphi 0, %s109
      %s113 = sphi 0, %s112
      %s129 = sphi 0, %s113
      %s135 = sphi 0, %s137
      %s138 = sphi 0, %s135
      %s139 = sphi 0, %s138
      %s155 = sphi 0, %s139
      %s161 = sphi 0, %s163
      %s164 = sphi 0, %s161
      %s165 = sphi 0, %s164
      %s181 = sphi 0, %s165
      %s185 = sphi 0, %s185
      %s187 = sphi 0, %s185
      %s188 = sphi 0, %s187
      %s202 = sphi 0, %s188
      %s206 = sphi 0, %s206
      %s208 = sphi 0, %s206
      %s209 = sphi 0, %s208
      %s223 = sphi 0, %s209
      %s227 = sphi 0, %s227
      %s229 = sphi 0, %s227
      %s230 = sphi 0, %s229
      %s244 = sphi 0, %s230
      %s248 = sphi 0, %s248
      %s250 = sphi 0, %s248
      %s251 = sphi 0, %s250
      %s265 = sphi 0, %s251
      %s269 = sphi 0, %s269
      %s271 = sphi 0, %s269
      %s272 = sphi 0, %s271
      %s286 = sphi 0, %s272
      %s290 = sphi 0, %s290
      %s292 = sphi 0, %s290
      %s293 = sphi 0, %s292
      %s307 = sphi 0, %s293
      %s311 = sphi 0, %s311
      %s313 = sphi 0, %s311
      %s314 = sphi 0, %s313
      %s328 = sphi 0, %s314
      %s332 = sphi 0, %s332
      %s334 = sphi 0, %s332
      %s335 = sphi 0, %s334
      %s349 = sphi 0, %s335
      %s353 = sphi 0, %s353
      %s355 = sphi 0, %s353
      %s356 = sphi 0, %s355
      %s370 = sphi 0, %s356
      %s376 = sphi 0, %s378
      %s379 = sphi 0, %s376
      %s380 = sphi 0, %s379
      %s396 = sphi 0, %s380
    $region4: #{tpu_custom_call.1} parent=1 // loop_header_branch
      %32 = sbr.rel (%p30) target = $region8
    $region5: #{tpu_custom_call.1} parent=1 // loop_body
      %s34 = ssub.s32 %s29, 1
      %s35 = ssub.s32 %s29, 2
      %s42 = sadd.s32 1, %s37
      %p43 = scmp.ge.s32.totalorder %s42, 4
      %s44 = scalar_select %p43, 0, %s42
      %s45 = sadd.s32 1, %s36
      %s46 = scalar_select %p43, %s45, %s36
      %p47 = scmp.ge.s32.totalorder %s46, 2
      %s48 = scalar_select %p47, 0, %s46
      %s49 = ssub.s32 %s36, %s48
      %s50 = ssub.s32 %s37, %s44
      %s51 = sor.u32 %s49, %s50
      %p52 = scmp.eq.s32.totalorder %s51, 0
      %s54 = sadd.s32 %s53, 1
      %s55 = scalar_select %p52, %s53, %s54
      %p58 = pneg %p52
      %p59 = scmp.eq.s32.totalorder %s29, 7
      %p60 = por %p58, %p59
      %p61 = scmp.ne.s32.totalorder %s53, %s56
      %p62 = scmp.eq.s32.totalorder %s29, 0
      %p63 = por %p61, %p62
      %p64 = scmp.ne.s32.totalorder %s53, %s56
      %p65 = scmp.eq.s32.totalorder %s34, 7
      %p66 = por %p64, %p65
      %p67 = scmp.ne.s32.totalorder %s56, %s57
      %p68 = scmp.eq.s32.totalorder %s34, 0
      %p69 = por %p67, %p68
      %p70 = scmp.ne.s32.totalorder %s56, %s57
      %p71 = scmp.eq.s32.totalorder %s35, 7
      %p72 = por %p70, %p71
      %p74 = scmp.ne.s32.totalorder %s57, %s73
      %p75 = scmp.eq.s32.totalorder %s35, 0
      %p76 = por %p74, %p75
      %s77 = ssub.s32 %s36, %s48
      %s78 = ssub.s32 %s37, %s44
      %s79 = sor.u32 %s77, %s78
      %p80 = scmp.eq.s32.totalorder %s79, 0
      %s82 = sadd.s32 %s81, 1
      %s83 = scalar_select %p80, %s81, %s82
      %p86 = pneg %p80
      %p87 = scmp.eq.s32.totalorder %s29, 7
      %p88 = por %p86, %p87
      %p89 = scmp.ne.s32.totalorder %s81, %s84
      %p90 = scmp.eq.s32.totalorder %s29, 0
      %p91 = por %p89, %p90
      %p92 = scmp.ne.s32.totalorder %s81, %s84
      %p93 = scmp.eq.s32.totalorder %s34, 7
      %p94 = por %p92, %p93
      %p95 = scmp.ne.s32.totalorder %s84, %s85
      %p96 = scmp.eq.s32.totalorder %s34, 0
      %p97 = por %p95, %p96
      %p98 = scmp.ne.s32.totalorder %s84, %s85
      %p99 = scmp.eq.s32.totalorder %s35, 7
      %p100 = por %p98, %p99
      %p102 = scmp.ne.s32.totalorder %s85, %s101
      %p103 = scmp.eq.s32.totalorder %s35, 0
      %p104 = por %p102, %p103
      %s105 = ssub.s32 %s36, %s48
      %s106 = ssub.s32 %s37, %s44
      %s107 = sor.u32 %s105, %s106
      %p108 = scmp.eq.s32.totalorder %s107, 0
      %s110 = sadd.s32 %s109, 1
      %s111 = scalar_select %p108, %s109, %s110
      %p114 = pneg %p108
      %p115 = scmp.eq.s32.totalorder %s29, 7
      %p116 = por %p114, %p115
      %p117 = scmp.ne.s32.totalorder %s109, %s112
      %p118 = scmp.eq.s32.totalorder %s29, 0
      %p119 = por %p117, %p118
      %p120 = scmp.ne.s32.totalorder %s109, %s112
      %p121 = scmp.eq.s32.totalorder %s34, 7
      %p122 = por %p120, %p121
      %p123 = scmp.ne.s32.totalorder %s112, %s113
      %p124 = scmp.eq.s32.totalorder %s34, 0
      %p125 = por %p123, %p124
      %p126 = scmp.ne.s32.totalorder %s112, %s113
      %p127 = scmp.eq.s32.totalorder %s35, 7
      %p128 = por %p126, %p127
      %p130 = scmp.ne.s32.totalorder %s113, %s129
      %p131 = scmp.eq.s32.totalorder %s35, 0
      %p132 = por %p130, %p131
      %s133 = ssub.s32 %s36, %s48
      %p134 = scmp.eq.s32.totalorder %s133, 0
      %s136 = sadd.s32 %s135, 1
      %s137 = scalar_select %p134, %s135, %s136
      %p140 = pneg %p134
      %p141 = scmp.eq.s32.totalorder %s29, 7
      %p142 = por %p140, %p141
      %p143 = scmp.ne.s32.totalorder %s135, %s138
      %p144 = scmp.eq.s32.totalorder %s29, 0
      %p145 = por %p143, %p144
      %p146 = scmp.ne.s32.totalorder %s135, %s138
      %p147 = scmp.eq.s32.totalorder %s34, 7
      %p148 = por %p146, %p147
      %p149 = scmp.ne.s32.totalorder %s138, %s139
      %p150 = scmp.eq.s32.totalorder %s34, 0
      %p151 = por %p149, %p150
      %p152 = scmp.ne.s32.totalorder %s138, %s139
      %p153 = scmp.eq.s32.totalorder %s35, 7
      %p154 = por %p152, %p153
      %p156 = scmp.ne.s32.totalorder %s139, %s155
      %p157 = scmp.eq.s32.totalorder %s35, 0
      %p158 = por %p156, %p157
      %s159 = ssub.s32 %s37, %s44
      %p160 = scmp.eq.s32.totalorder %s159, 0
      %s162 = sadd.s32 %s161, 1
      %s163 = scalar_select %p160, %s161, %s162
      %p166 = pneg %p160
      %p167 = scmp.eq.s32.totalorder %s29, 7
      %p168 = por %p166, %p167
      %p169 = scmp.ne.s32.totalorder %s161, %s164
      %p170 = scmp.eq.s32.totalorder %s29, 0
      %p171 = por %p169, %p170
      %p172 = scmp.ne.s32.totalorder %s161, %s164
      %p173 = scmp.eq.s32.totalorder %s34, 7
      %p174 = por %p172, %p173
      %p175 = scmp.ne.s32.totalorder %s164, %s165
      %p176 = scmp.eq.s32.totalorder %s34, 0
      %p177 = por %p175, %p176
      %p178 = scmp.ne.s32.totalorder %s164, %s165
      %p179 = scmp.eq.s32.totalorder %s35, 7
      %p180 = por %p178, %p179
      %p182 = scmp.ne.s32.totalorder %s165, %s181
      %p183 = scmp.eq.s32.totalorder %s35, 0
      %p184 = por %p182, %p183
      %s186 = sadd.s32 %s185, 1
      %p189 = scmp.eq.s32.totalorder %s29, 7
      %p190 = scmp.ne.s32.totalorder %s185, %s187
      %p191 = scmp.eq.s32.totalorder %s29, 0
      %p192 = por %p190, %p191
      %p193 = scmp.ne.s32.totalorder %s185, %s187
      %p194 = scmp.eq.s32.totalorder %s34, 7
      %p195 = por %p193, %p194
      %p196 = scmp.ne.s32.totalorder %s187, %s188
      %p197 = scmp.eq.s32.totalorder %s34, 0
      %p198 = por %p196, %p197
      %p199 = scmp.ne.s32.totalorder %s187, %s188
      %p200 = scmp.eq.s32.totalorder %s35, 7
      %p201 = por %p199, %p200
      %p203 = scmp.ne.s32.totalorder %s188, %s202
      %p204 = scmp.eq.s32.totalorder %s35, 0
      %p205 = por %p203, %p204
      %s207 = sadd.s32 %s206, 1
      %p210 = scmp.eq.s32.totalorder %s29, 7
      %p211 = scmp.ne.s32.totalorder %s206, %s208
      %p212 = scmp.eq.s32.totalorder %s29, 0
      %p213 = por %p211, %p212
      %p214 = scmp.ne.s32.totalorder %s206, %s208
      %p215 = scmp.eq.s32.totalorder %s34, 7
      %p216 = por %p214, %p215
      %p217 = scmp.ne.s32.totalorder %s208, %s209
      %p218 = scmp.eq.s32.totalorder %s34, 0
      %p219 = por %p217, %p218
      %p220 = scmp.ne.s32.totalorder %s208, %s209
      %p221 = scmp.eq.s32.totalorder %s35, 7
      %p222 = por %p220, %p221
      %p224 = scmp.ne.s32.totalorder %s209, %s223
      %p225 = scmp.eq.s32.totalorder %s35, 0
      %p226 = por %p224, %p225
      %s228 = sadd.s32 %s227, 1
      %p231 = scmp.eq.s32.totalorder %s29, 7
      %p232 = scmp.ne.s32.totalorder %s227, %s229
      %p233 = scmp.eq.s32.totalorder %s29, 0
      %p234 = por %p232, %p233
      %p235 = scmp.ne.s32.totalorder %s227, %s229
      %p236 = scmp.eq.s32.totalorder %s34, 7
      %p237 = por %p235, %p236
      %p238 = scmp.ne.s32.totalorder %s229, %s230
      %p239 = scmp.eq.s32.totalorder %s34, 0
      %p240 = por %p238, %p239
      %p241 = scmp.ne.s32.totalorder %s229, %s230
      %p242 = scmp.eq.s32.totalorder %s35, 7
      %p243 = por %p241, %p242
      %p245 = scmp.ne.s32.totalorder %s230, %s244
      %p246 = scmp.eq.s32.totalorder %s35, 0
      %p247 = por %p245, %p246
      %s249 = sadd.s32 %s248, 1
      %p252 = scmp.eq.s32.totalorder %s29, 7
      %p253 = scmp.ne.s32.totalorder %s248, %s250
      %p254 = scmp.eq.s32.totalorder %s29, 0
      %p255 = por %p253, %p254
      %p256 = scmp.ne.s32.totalorder %s248, %s250
      %p257 = scmp.eq.s32.totalorder %s34, 7
      %p258 = por %p256, %p257
      %p259 = scmp.ne.s32.totalorder %s250, %s251
      %p260 = scmp.eq.s32.totalorder %s34, 0
      %p261 = por %p259, %p260
      %p262 = scmp.ne.s32.totalorder %s250, %s251
      %p263 = scmp.eq.s32.totalorder %s35, 7
      %p264 = por %p262, %p263
      %p266 = scmp.ne.s32.totalorder %s251, %s265
      %p267 = scmp.eq.s32.totalorder %s35, 0
      %p268 = por %p266, %p267
      %s270 = sadd.s32 %s269, 1
      %p273 = scmp.eq.s32.totalorder %s29, 7
      %p274 = scmp.ne.s32.totalorder %s269, %s271
      %p275 = scmp.eq.s32.totalorder %s29, 0
      %p276 = por %p274, %p275
      %p277 = scmp.ne.s32.totalorder %s269, %s271
      %p278 = scmp.eq.s32.totalorder %s34, 7
      %p279 = por %p277, %p278
      %p280 = scmp.ne.s32.totalorder %s271, %s272
      %p281 = scmp.eq.s32.totalorder %s34, 0
      %p282 = por %p280, %p281
      %p283 = scmp.ne.s32.totalorder %s271, %s272
      %p284 = scmp.eq.s32.totalorder %s35, 7
      %p285 = por %p283, %p284
      %p287 = scmp.ne.s32.totalorder %s272, %s286
      %p288 = scmp.eq.s32.totalorder %s35, 0
      %p289 = por %p287, %p288
      %s291 = sadd.s32 %s290, 1
      %p294 = scmp.eq.s32.totalorder %s29, 7
      %p295 = scmp.ne.s32.totalorder %s290, %s292
      %p296 = scmp.eq.s32.totalorder %s29, 0
      %p297 = por %p295, %p296
      %p298 = scmp.ne.s32.totalorder %s290, %s292
      %p299 = scmp.eq.s32.totalorder %s34, 7
      %p300 = por %p298, %p299
      %p301 = scmp.ne.s32.totalorder %s292, %s293
      %p302 = scmp.eq.s32.totalorder %s34, 0
      %p303 = por %p301, %p302
      %p304 = scmp.ne.s32.totalorder %s292, %s293
      %p305 = scmp.eq.s32.totalorder %s35, 7
      %p306 = por %p304, %p305
      %p308 = scmp.ne.s32.totalorder %s293, %s307
      %p309 = scmp.eq.s32.totalorder %s35, 0
      %p310 = por %p308, %p309
      %s312 = sadd.s32 %s311, 1
      %p315 = scmp.eq.s32.totalorder %s29, 7
      %p316 = scmp.ne.s32.totalorder %s311, %s313
      %p317 = scmp.eq.s32.totalorder %s29, 0
      %p318 = por %p316, %p317
      %p319 = scmp.ne.s32.totalorder %s311, %s313
      %p320 = scmp.eq.s32.totalorder %s34, 7
      %p321 = por %p319, %p320
      %p322 = scmp.ne.s32.totalorder %s313, %s314
      %p323 = scmp.eq.s32.totalorder %s34, 0
      %p324 = por %p322, %p323
      %p325 = scmp.ne.s32.totalorder %s313, %s314
      %p326 = scmp.eq.s32.totalorder %s35, 7
      %p327 = por %p325, %p326
      %p329 = scmp.ne.s32.totalorder %s314, %s328
      %p330 = scmp.eq.s32.totalorder %s35, 0
      %p331 = por %p329, %p330
      %s333 = sadd.s32 %s332, 1
      %p336 = scmp.eq.s32.totalorder %s29, 7
      %p337 = scmp.ne.s32.totalorder %s332, %s334
      %p338 = scmp.eq.s32.totalorder %s29, 0
      %p339 = por %p337, %p338
      %p340 = scmp.ne.s32.totalorder %s332, %s334
      %p341 = scmp.eq.s32.totalorder %s34, 7
      %p342 = por %p340, %p341
      %p343 = scmp.ne.s32.totalorder %s334, %s335
      %p344 = scmp.eq.s32.totalorder %s34, 0
      %p345 = por %p343, %p344
      %p346 = scmp.ne.s32.totalorder %s334, %s335
      %p347 = scmp.eq.s32.totalorder %s35, 7
      %p348 = por %p346, %p347
      %p350 = scmp.ne.s32.totalorder %s335, %s349
      %p351 = scmp.eq.s32.totalorder %s35, 0
      %p352 = por %p350, %p351
      %s354 = sadd.s32 %s353, 1
      %p357 = scmp.eq.s32.totalorder %s29, 7
      %p358 = scmp.ne.s32.totalorder %s353, %s355
      %p359 = scmp.eq.s32.totalorder %s29, 0
      %p360 = por %p358, %p359
      %p361 = scmp.ne.s32.totalorder %s353, %s355
      %p362 = scmp.eq.s32.totalorder %s34, 7
      %p363 = por %p361, %p362
      %p364 = scmp.ne.s32.totalorder %s355, %s356
      %p365 = scmp.eq.s32.totalorder %s34, 0
      %p366 = por %p364, %p365
      %p367 = scmp.ne.s32.totalorder %s355, %s356
      %p368 = scmp.eq.s32.totalorder %s35, 7
      %p369 = por %p367, %p368
      %p371 = scmp.ne.s32.totalorder %s356, %s370
      %p372 = scmp.eq.s32.totalorder %s35, 0
      %p373 = por %p371, %p372
      %s374 = ssub.s32 %s36, %s48
      %p375 = scmp.eq.s32.totalorder %s374, 0
      %s377 = sadd.s32 %s376, 1
      %s378 = scalar_select %p375, %s376, %s377
      %p381 = pneg %p375
      %p382 = scmp.eq.s32.totalorder %s29, 7
      %p383 = por %p381, %p382
      %p384 = scmp.ne.s32.totalorder %s376, %s379
      %p385 = scmp.eq.s32.totalorder %s29, 0
      %p386 = por %p384, %p385
      %p387 = scmp.ne.s32.totalorder %s376, %s379
      %p388 = scmp.eq.s32.totalorder %s34, 7
      %p389 = por %p387, %p388
      %p390 = scmp.ne.s32.totalorder %s379, %s380
      %p391 = scmp.eq.s32.totalorder %s34, 0
      %p392 = por %p390, %p391
      %p393 = scmp.ne.s32.totalorder %s379, %s380
      %p394 = scmp.eq.s32.totalorder %s35, 7
      %p395 = por %p393, %p394
      %p397 = scmp.ne.s32.totalorder %s380, %s396
      %p398 = scmp.eq.s32.totalorder %s35, 0
      %p399 = por %p397, %p398
      %p400 = scmp.le.s32.totalorder 1, %s29
      %p401 = scmp.lt.s32.totalorder %s29, 9
      %p402 = pnand %p400, %p401
      %p403 = pneg %p402
      // Predicated region
      $region9: #{tpu_custom_call.1} parent=5 // pred_check
        _
      $region10: #{tpu_custom_call.1} parent=5 // pred_check_branch
        %405 = sbr.rel (%p402) target = $region12
      $region11: #{tpu_custom_call.1} parent=5 // pred_region
        %s406 = ssub.s32 %s29, 1
        // Predicated region
        $region13: #{tpu_custom_call.1} parent=11 // pred_check
          %p407 = pneg %p198
        $region14: #{tpu_custom_call.1} parent=11 // pred_check_branch
          %409 = sbr.rel (%p407) target = $region16
        $region15: #{tpu_custom_call.1} parent=11 // pred_region
          _
        $region16: #{tpu_custom_call.1} parent=11 // pred_fallthru
          _
        // Predicated region
        $region17: #{tpu_custom_call.1} parent=11 // pred_check
          %p410 = pneg %p219
        $region18: #{tpu_custom_call.1} parent=11 // pred_check_branch
          %412 = sbr.rel (%p410) target = $region20
        $region19: #{tpu_custom_call.1} parent=11 // pred_region
          _
        $region20: #{tpu_custom_call.1} parent=11 // pred_fallthru
          _
        // Predicated region
        $region21: #{tpu_custom_call.1} parent=11 // pred_check
          %p413 = pneg %p240
        $region22: #{tpu_custom_call.1} parent=11 // pred_check_branch
          %415 = sbr.rel (%p413) target = $region24
        $region23: #{tpu_custom_call.1} parent=11 // pred_region
          _
        $region24: #{tpu_custom_call.1} parent=11 // pred_fallthru
          _
        // Predicated region
        $region25: #{tpu_custom_call.1} parent=11 // pred_check
          %p416 = pneg %p261
        $region26: #{tpu_custom_call.1} parent=11 // pred_check_branch
          %418 = sbr.rel (%p416) target = $region28
        $region27: #{tpu_custom_call.1} parent=11 // pred_region
          %s420 = ssub.s32 512, 512
          %421 = vsyncadd [#allocation7], %s420
          %s422 = sshll.u32 [#allocation8], 4
          %s423 = int_to_ptr.vmem [resolvable:$true] %s422
          %428 = dma.hbm_to_vmem [thread:$0]  %s8, 512, %s423, [#allocation7], 128, 128, 8
        $region28: #{tpu_custom_call.1} parent=11 // pred_fallthru
          _
        // Predicated region
        $region29: #{tpu_custom_call.1} parent=11 // pred_check
          %p429 = pneg %p282
        $region30: #{tpu_custom_call.1} parent=11 // pred_check_branch
          %431 = sbr.rel (%p429) target = $region32
        $region31: #{tpu_custom_call.1} parent=11 // pred_region
          _
        $region32: #{tpu_custom_call.1} parent=11 // pred_fallthru
          _
        // Predicated region
        $region33: #{tpu_custom_call.1} parent=11 // pred_check
          %p432 = pneg %p303
        $region34: #{tpu_custom_call.1} parent=11 // pred_check_branch
          %434 = sbr.rel (%p432) target = $region36
        $region35: #{tpu_custom_call.1} parent=11 // pred_region
          _
        $region36: #{tpu_custom_call.1} parent=11 // pred_fallthru
          _
        // Predicated region
        $region37: #{tpu_custom_call.1} parent=11 // pred_check
          %p435 = pneg %p324
        $region38: #{tpu_custom_call.1} parent=11 // pred_check_branch
          %437 = sbr.rel (%p435) target = $region40
        $region39: #{tpu_custom_call.1} parent=11 // pred_region
          _
        $region40: #{tpu_custom_call.1} parent=11 // pred_fallthru
          _
        // Predicated region
        $region41: #{tpu_custom_call.1} parent=11 // pred_check
          %p438 = pneg %p345
        $region42: #{tpu_custom_call.1} parent=11 // pred_check_branch
          %440 = sbr.rel (%p438) target = $region44
        $region43: #{tpu_custom_call.1} parent=11 // pred_region
          _
        $region44: #{tpu_custom_call.1} parent=11 // pred_fallthru
          _
        // Predicated region
        $region45: #{tpu_custom_call.1} parent=11 // pred_check
          %p441 = pneg %p366
        $region46: #{tpu_custom_call.1} parent=11 // pred_check_branch
          %443 = sbr.rel (%p441) target = $region48
        $region47: #{tpu_custom_call.1} parent=11 // pred_region
          _
        $region48: #{tpu_custom_call.1} parent=11 // pred_fallthru
          _
      $region12: #{tpu_custom_call.1} parent=5 // pred_fallthru
        _
      %p444 = scmp.lt.s32.totalorder %s29, 8
      // Predicated region
      $region49: #{tpu_custom_call.1} parent=5 // pred_check
        %p445 = pneg %p444
      $region50: #{tpu_custom_call.1} parent=5 // pred_check_branch
        %447 = sbr.rel (%p445) target = $region52
      $region51: #{tpu_custom_call.1} parent=5 // pred_region
        // Predicated region
        $region53: #{tpu_custom_call.1} parent=51 // pred_check
          %p448 = pneg %p63
        $region54: #{tpu_custom_call.1} parent=51 // pred_check_branch
          %450 = sbr.rel (%p448) target = $region56
        $region55: #{tpu_custom_call.1} parent=51 // pred_region
          %p451 = scmp.lt.s32.totalorder %s36, 1
          %s452 = scalar_select %p451, %s36, 1
          %p453 = scmp.lt.s32.totalorder %s37, 3
          %s454 = scalar_select %p453, %s37, 3
          %s455 = smul.addr %s452, 4
          %s456 = sadd.s32 %s454, %s455
          %s457 = smul.addr %s456, 8
          %s458 = scalar_lea.vmem %s0, %s457
        $region56: #{tpu_custom_call.1} parent=51 // pred_fallthru
          _
        // Predicated region
        $region57: #{tpu_custom_call.1} parent=51 // pred_check
          %p459 = pneg %p91
        $region58: #{tpu_custom_call.1} parent=51 // pred_check_branch
          %461 = sbr.rel (%p459) target = $region60
        $region59: #{tpu_custom_call.1} parent=51 // pred_region
          %p462 = scmp.lt.s32.totalorder %s36, 1
          %s463 = scalar_select %p462, %s36, 1
          %p464 = scmp.lt.s32.totalorder %s37, 3
          %s465 = scalar_select %p464, %s37, 3
          %s466 = smul.addr %s463, 4
          %s467 = sadd.s32 %s465, %s466
          %s468 = smul.addr %s467, 8
          %s469 = scalar_lea.vmem %s1, %s468
        $region60: #{tpu_custom_call.1} parent=51 // pred_fallthru
          _
        // Predicated region
        $region61: #{tpu_custom_call.1} parent=51 // pred_check
          %p470 = pneg %p119
        $region62: #{tpu_custom_call.1} parent=51 // pred_check_branch
          %472 = sbr.rel (%p470) target = $region64
        $region63: #{tpu_custom_call.1} parent=51 // pred_region
          %s473 = sand.u32 %s109, 1
          %s474 = scalar_lea.sflag [#allocation4], %s473
          %s475 = sand.u32 %s109, 1
          %s476 = smul.addr %s475, 8
          %s477 = scalar_lea.vmem [#allocation3], %s476
          %s479 = ssub.s32 128, 128
          %480 = vsyncadd %s474, %s479
          %s481 = smul.addr %s36, 4
          %s482 = sadd.s32 %s37, %s481
          %s483 = smul.addr %s482, 128
          %s484 = scalar_lea.hbm %s2, %s483
          %s486 = sshll.u32 %s477, 4
          %s487 = int_to_ptr.vmem [resolvable:$true] %s486
          %489 = dma.hbm_to_vmem [thread:$0]  %s484, 128, %s487, %s474
        $region64: #{tpu_custom_call.1} parent=51 // pred_fallthru
          _
        // Predicated region
        $region65: #{tpu_custom_call.1} parent=51 // pred_check
          %p490 = pneg %p145
        $region66: #{tpu_custom_call.1} parent=51 // pred_check_branch
          %492 = sbr.rel (%p490) target = $region68
        $region67: #{tpu_custom_call.1} parent=51 // pred_region
          %s493 = sand.u32 %s29, 1
          %s494 = scalar_lea.sflag [#allocation7], %s493
          %s495 = sand.u32 %s135, 1
          %s496 = smul.addr %s495, 8
          %s497 = scalar_lea.vmem [#allocation6], %s496
          %s499 = ssub.s32 128, 128
          %500 = vsyncadd %s494, %s499
          %s501 = smul.addr %s36, 128
          %s502 = scalar_lea.hbm %s3, %s501
          %s504 = sshll.u32 %s497, 4
          %s505 = int_to_ptr.vmem [resolvable:$true] %s504
          %507 = dma.hbm_to_vmem [thread:$0]  %s502, 128, %s505, %s494
        $region68: #{tpu_custom_call.1} parent=51 // pred_fallthru
          _
        // Predicated region
        $region69: #{tpu_custom_call.1} parent=51 // pred_check
          %p508 = pneg %p171
        $region70: #{tpu_custom_call.1} parent=51 // pred_check_branch
          %510 = sbr.rel (%p508) target = $region72
        $region71: #{tpu_custom_call.1} parent=51 // pred_region
          %p511 = scmp.lt.s32.totalorder %s37, 3
          %s512 = scalar_select %p511, %s37, 3
          %s513 = smul.addr %s512, 8
          %s514 = scalar_lea.vmem %s4, %s513
        $region72: #{tpu_custom_call.1} parent=51 // pred_fallthru
          _
      $region52: #{tpu_custom_call.1} parent=5 // pred_fallthru
        _
      %p515 = scmp.le.s32.totalorder 1, %s29
      %p516 = scmp.lt.s32.totalorder %s29, 9
      %p517 = pnand %p515, %p516
      %p518 = pneg %p517
      // Predicated region
      $region73: #{tpu_custom_call.1} parent=5 // pred_check
        _
      $region74: #{tpu_custom_call.1} parent=5 // pred_check_branch
        %520 = sbr.rel (%p517) target = $region76
      $region75: #{tpu_custom_call.1} parent=5 // pred_region
        %s521 = ssub.s32 %s29, 1
        %s522 = sand.u32 %s112, 1
        %s523 = scalar_lea.sflag [#allocation4], %s522
        %s524 = sand.u32 %s112, 1
        %s525 = smul.addr %s524, 8
        %s526 = scalar_lea.vmem [#allocation3], %s525
        // Predicated region
        $region77: #{tpu_custom_call.1} parent=75 // pred_check
          %p527 = pneg %p125
        $region78: #{tpu_custom_call.1} parent=75 // pred_check_branch
          %529 = sbr.rel (%p527) target = $region80
        $region79: #{tpu_custom_call.1} parent=75 // pred_region
          %530 = dma.done %s523, 128
        $region80: #{tpu_custom_call.1} parent=75 // pred_fallthru
          _
        %s531 = sand.u32 %s34, 1
        %s532 = scalar_lea.sflag [#allocation7], %s531
        %s533 = sand.u32 %s138, 1
        %s534 = smul.addr %s533, 8
        %s535 = scalar_lea.vmem [#allocation6], %s534
        // Predicated region
        $region81: #{tpu_custom_call.1} parent=75 // pred_check
          %p536 = pneg %p151
        $region82: #{tpu_custom_call.1} parent=75 // pred_check_branch
          %538 = sbr.rel (%p536) target = $region84
        $region83: #{tpu_custom_call.1} parent=75 // pred_region
          %539 = dma.done %s532, 128
        $region84: #{tpu_custom_call.1} parent=75 // pred_fallthru
          _
        // Predicated region
        $region85: #{tpu_custom_call.1} parent=75 // pred_check
          %p540 = pneg %p261
        $region86: #{tpu_custom_call.1} parent=75 // pred_check_branch
          %542 = sbr.rel (%p540) target = $region88
        $region87: #{tpu_custom_call.1} parent=75 // pred_region
          %543 = dma.done [#allocation7], 512
        $region88: #{tpu_custom_call.1} parent=75 // pred_fallthru
          _
        %p544 = scmp.lt.s32.totalorder %s38, 1
        %s545 = scalar_select %p544, %s38, 1
        %p546 = scmp.lt.s32.totalorder %s39, 3
        %s547 = scalar_select %p546, %s39, 3
        %s548 = smul.addr %s545, 4
        %s549 = sadd.s32 %s547, %s548
        %s550 = smul.addr %s549, 8
        %s551 = scalar_lea.vmem %s0, %s550
        %p552 = pneg %p69
        %p553 = pneg %p66
        %p554 = scmp.lt.s32.totalorder %s38, 1
        %s555 = scalar_select %p554, %s38, 1
        %p556 = scmp.lt.s32.totalorder %s39, 3
        %s557 = scalar_select %p556, %s39, 3
        %s558 = smul.addr %s555, 4
        %s559 = sadd.s32 %s557, %s558
        %s560 = smul.addr %s559, 8
        %s561 = scalar_lea.vmem %s1, %s560
        %p562 = pneg %p97
        %p563 = pneg %p94
        %s564 = sand.u32 %s112, 1
        %s565 = scalar_lea.sflag [#allocation4], %s564
        %s566 = sand.u32 %s112, 1
        %s567 = smul.addr %s566, 8
        %s568 = scalar_lea.vmem [#allocation3], %s567
        %p569 = pneg %p125
        %p570 = pneg %p122
        %s571 = sand.u32 %s34, 1
        %s572 = scalar_lea.sflag [#allocation7], %s571
        %s573 = sand.u32 %s138, 1
        %s574 = smul.addr %s573, 8
        %s575 = scalar_lea.vmem [#allocation6], %s574
        %p576 = pneg %p151
        %p577 = pneg %p148
        %p578 = scmp.lt.s32.totalorder %s39, 3
        %s579 = scalar_select %p578, %s39, 3
        %s580 = smul.addr %s579, 8
        %s581 = scalar_lea.vmem %s4, %s580
        %p582 = pneg %p177
        %p583 = pneg %p174
        %p584 = pneg %p198
        %p585 = pneg %p195
        %p586 = pneg %p219
        %p587 = pneg %p216
        %p588 = pneg %p240
        %p589 = pneg %p237
        %p590 = pneg %p261
        %p591 = pneg %p258
        %p592 = pneg %p282
        %p593 = pneg %p279
        %p594 = pneg %p303
        %p595 = pneg %p300
        %p596 = pneg %p324
        %p597 = pneg %p321
        %p598 = pneg %p345
        %p599 = pneg %p342
        %p600 = pneg %p366
        %p601 = pneg %p363
        %p602 = pneg %p392
        %p603 = pneg %p389
        %s604 = sand.u32 %s379, 1
        %s605 = scalar_lea.sflag [#allocation5], %s604
        %s606 = sand.u32 %s379, 1
        %s607 = smul.addr %s606, 8
        %s608 = scalar_lea.vmem [#allocation9], %s607
        %p609 = scmp.lt.s32.totalorder %s38, 1
        %s610 = scalar_select %p609, %s38, 1
        %p611 = scmp.lt.s32.totalorder %s39, 3
        %s612 = scalar_select %p611, %s39, 3
        %s613 = smul.addr %s610, 4
        %s614 = sadd.s32 %s612, %s613
        %s615 = smul.addr %s614, 8
        %s616 = scalar_lea.vmem %s0, %s615
        %p617 = scmp.lt.s32.totalorder %s38, 1
        %s618 = scalar_select %p617, %s38, 1
        %p619 = scmp.lt.s32.totalorder %s39, 3
        %s620 = scalar_select %p619, %s39, 3
        %s621 = smul.addr %s618, 4
        %s622 = sadd.s32 %s620, %s621
        %s623 = smul.addr %s622, 8
        %s624 = scalar_lea.vmem %s1, %s623
        %p625 = scmp.lt.s32.totalorder %s39, 3
        %s626 = scalar_select %p625, %s39, 3
        %s627 = smul.addr %s626, 8
        %s628 = scalar_lea.vmem %s4, %s627
        %p629 = scmp.eq.s32.totalorder %s39, 0
        // Predicated region
        $region89: #{tpu_custom_call.1} parent=75 // pred_check
          %p630 = pneg %p629
        $region90: #{tpu_custom_call.1} parent=75 // pred_check_branch
          %632 = sbr.rel (%p630) target = $region92
        $region91: #{tpu_custom_call.1} parent=75 // pred_region
          %vm633 = vcmask 261120
          %634 = vst.msk [vmem:[#allocation2] sm:$0xff] %vm633, 0.0
        $region92: #{tpu_custom_call.1} parent=75 // pred_fallthru
          _
        %v635 = vld [vmem:[%s526] sm:$0xff]
        %v636 = vmul.f32 %v635, 0.17677669
        %v637 = vld [vmem:[%s624] sm:$0xff]
        %v638 = vld [vmem:[%s616] sm:$0xff]
        %vm639 = vcmask 64512
        %v641 = vsel %vm639, %v636, 0
        %v644 = vsel %vm639, %v637, 0
        %646 = vmatprep.subr.mxu0 0.0
        %647 = vmatpush1.xpose.msra.mxu0 0.0
        %648 = vmatprep.subr.mxu0 0.0
        %649 = vmatpush1.xpose.msra.mxu0 0.0
        %650 = vmatprep.subr.mxu0 0.0
        %651 = vmatpush1.xpose.msra.mxu0 0.0
        %652 = vmatprep.subr.mxu0 0.0
        %653 = vmatpush1.xpose.msra.mxu0 0.0
        %654 = vmatprep.subr.mxu0 0.0
        %655 = vmatpush1.xpose.msra.mxu0 0.0
        %656 = vmatprep.subr.mxu0 0.0
        %657 = vmatpush1.xpose.msra.mxu0 0.0
        %658 = vmatprep.subr.mxu0 0.0
        %659 = vmatpush1.xpose.msra.mxu0 0.0
        %660 = vmatprep.subr.mxu0 0.0
        %661 = vmatpush1.xpose.msra.mxu0 0.0
        %662 = vmatprep.subr.mxu0 0.0
        %663 = vmatpush1.xpose.msra.mxu0 0.0
        %664 = vmatprep.subr.mxu0 0.0
        %665 = vmatpush1.xpose.msra.mxu0 0.0
        %666 = vmatprep.subr.mxu0 0.0
        %667 = vmatpush1.xpose.msra.mxu0 0.0
        %668 = vmatprep.subr.mxu0 0.0
        %669 = vmatpush1.xpose.msra.mxu0 0.0
        %670 = vmatprep.subr.mxu0 0.0
        %671 = vmatpush1.xpose.msra.mxu0 0.0
        %672 = vmatprep.subr.mxu0 0.0
        %673 = vmatpush1.xpose.msra.mxu0 0.0
        %674 = vmatprep.subr.mxu0 0.0
        %675 = vmatpush1.xpose.msra.mxu0 0.0
        %676 = vmatprep.subr.mxu0 0.0
        %677 = vmatpush1.xpose.msra.mxu0 %v644
        %678 = vmatprep.subr.mxu0 0.0
        %679 = vmatpush2.xpose.msra.mxu0 0.0
        %680 = vmatprep.subr.mxu0 0.0
        %681 = vmatpush2.xpose.msra.mxu0 0.0
        %682 = vmatprep.subr.mxu0 0.0
        %683 = vmatpush2.xpose.msra.mxu0 0.0
        %684 = vmatprep.subr.mxu0 0.0
        %685 = vmatpush2.xpose.msra.mxu0 0.0
        %686 = vmatprep.subr.mxu0 0.0
        %687 = vmatpush2.xpose.msra.mxu0 0.0
        %688 = vmatprep.subr.mxu0 0.0
        %689 = vmatpush2.xpose.msra.mxu0 0.0
        %690 = vmatprep.subr.mxu0 0.0
        %691 = vmatpush2.xpose.msra.mxu0 0.0
        %692 = vmatprep.subr.mxu0 0.0
        %693 = vmatpush2.xpose.msra.mxu0 0.0
        %694 = vmatprep.subr.mxu0 0.0
        %695 = vmatpush2.xpose.msra.mxu0 0.0
        %696 = vmatprep.subr.mxu0 0.0
        %697 = vmatpush2.xpose.msra.mxu0 0.0
        %698 = vmatprep.subr.mxu0 0.0
        %699 = vmatpush2.xpose.msra.mxu0 0.0
        %700 = vmatprep.subr.mxu0 0.0
        %701 = vmatpush2.xpose.msra.mxu0 0.0
        %702 = vmatprep.subr.mxu0 0.0
        %703 = vmatpush2.xpose.msra.mxu0 0.0
        %704 = vmatprep.subr.mxu0 0.0
        %705 = vmatpush2.xpose.msra.mxu0 0.0
        %706 = vmatprep.subr.mxu0 0.0
        %707 = vmatpush2.xpose.msra.mxu0 0.0
        %708 = vmatprep.subr.mxu0 0.0
        %709 = vmatpush2.xpose.msra.mxu0 0.0
        %710 = vmatprep.mubr.f32.mxu0 0.0
        %711 = vmatmul.mubr.f32.gmra.mxu0 %v641
        %v712 = vpop.f32.mrf.mxu0
        %v713 = vadd.f32 0.0, %v712
        %v714 = vpop.f32.mrf.mxu0
        %715 = vdwg.mxu0
        %v716 = vsel %vm639, %v713, -inf
        %717 = vmax.xlane.f32.xlu0 %v716
        %v718 = vpop.xlane.xlu0 %717
        %v719 = vsub.f32 %v713, %v718
        %v720 = vmul.f32 %v719, 1.442695
        %v721 = vpow.pop %v720
        %v722 = vsel %vm639, %v721, 0.0
        %723 = vadd.xlane.f32.xlu0 %v722
        %v724 = vpop.xlane.xlu0 %723
        %v726 = vsel %vm639, %v721, 0
        %728 = vmatprep.subr.mxu0 0.0
        %729 = vmatpush1.msra.mxu0 0.0
        %730 = vmatprep.subr.mxu0 0.0
        %731 = vmatpush1.msra.mxu0 0.0
        %732 = vmatprep.subr.mxu0 0.0
        %733 = vmatpush1.msra.mxu0 0.0
        %734 = vmatprep.subr.mxu0 0.0
        %735 = vmatpush1.msra.mxu0 0.0
        %736 = vmatprep.subr.mxu0 0.0
        %737 = vmatpush1.msra.mxu0 0.0
        %738 = vmatprep.subr.mxu0 0.0
        %739 = vmatpush1.msra.mxu0 0.0
        %740 = vmatprep.subr.mxu0 0.0
        %741 = vmatpush1.msra.mxu0 0.0
        %742 = vmatprep.subr.mxu0 0.0
        %743 = vmatpush1.msra.mxu0 0.0
        %744 = vmatprep.subr.mxu0 0.0
        %745 = vmatpush1.msra.mxu0 0.0
        %746 = vmatprep.subr.mxu0 0.0
        %747 = vmatpush1.msra.mxu0 0.0
        %748 = vmatprep.subr.mxu0 0.0
        %749 = vmatpush1.msra.mxu0 0.0
        %750 = vmatprep.subr.mxu0 0.0
        %751 = vmatpush1.msra.mxu0 0.0
        %752 = vmatprep.subr.mxu0 0.0
        %753 = vmatpush1.msra.mxu0 0.0
        %754 = vmatprep.subr.mxu0 0.0
        %755 = vmatpush1.msra.mxu0 0.0
        %756 = vmatprep.subr.mxu0 0.0
        %757 = vmatpush1.msra.mxu0 0.0
        %758 = vmatprep.subr.mxu0 0.0
        %759 = vmatpush1.msra.mxu0 %v638
        %760 = vmatprep.subr.mxu0 0.0
        %761 = vmatpush2.msra.mxu0 0.0
        %762 = vmatprep.subr.mxu0 0.0
        %763 = vmatpush2.msra.mxu0 0.0
        %764 = vmatprep.subr.mxu0 0.0
        %765 = vmatpush2.msra.mxu0 0.0
        %766 = vmatprep.subr.mxu0 0.0
        %767 = vmatpush2.msra.mxu0 0.0
        %768 = vmatprep.subr.mxu0 0.0
        %769 = vmatpush2.msra.mxu0 0.0
        %770 = vmatprep.subr.mxu0 0.0
        %771 = vmatpush2.msra.mxu0 0.0
        %772 = vmatprep.subr.mxu0 0.0
        %773 = vmatpush2.msra.mxu0 0.0
        %774 = vmatprep.subr.mxu0 0.0
        %775 = vmatpush2.msra.mxu0 0.0
        %776 = vmatprep.subr.mxu0 0.0
        %777 = vmatpush2.msra.mxu0 0.0
        %778 = vmatprep.subr.mxu0 0.0
        %779 = vmatpush2.msra.mxu0 0.0
        %780 = vmatprep.subr.mxu0 0.0
        %781 = vmatpush2.msra.mxu0 0.0
        %782 = vmatprep.subr.mxu0 0.0
        %783 = vmatpush2.msra.mxu0 0.0
        %784 = vmatprep.subr.mxu0 0.0
        %785 = vmatpush2.msra.mxu0 0.0
        %786 = vmatprep.subr.mxu0 0.0
        %787 = vmatpush2.msra.mxu0 0.0
        %788 = vmatprep.subr.mxu0 0.0
        %789 = vmatpush2.msra.mxu0 0.0
        %790 = vmatprep.subr.mxu0 0.0
        %791 = vmatpush2.msra.mxu0 0.0
        %792 = vmatprep.mubr.f32.mxu0 0.0
        %793 = vmatmul.mubr.f32.gmra.mxu0 %v726
        %v794 = vpop.f32.mrf.mxu0
        %v795 = vadd.f32 0.0, %v794
        %v796 = vpop.f32.mrf.mxu0
        %797 = vdwg.mxu0
        %v798 = vrcp.pop %v724
        %v799 = vmul.f32 %v795, %v798
        %v800 = vld [vmem:[#allocation2] sm:$0xff]
        %v801 = vld [vmem:[%s628] sm:$0xff]
        %v803 = vsel %vm639, %v799, 0
        %805 = vmatprep.subr.mxu0 0.0
        %806 = vmatpush1.msra.mxu0 0.0
        %807 = vmatprep.subr.mxu0 0.0
        %808 = vmatpush1.msra.mxu0 0.0
        %809 = vmatprep.subr.mxu0 0.0
        %810 = vmatpush1.msra.mxu0 0.0
        %811 = vmatprep.subr.mxu0 0.0
        %812 = vmatpush1.msra.mxu0 0.0
        %813 = vmatprep.subr.mxu0 0.0
        %814 = vmatpush1.msra.mxu0 0.0
        %815 = vmatprep.subr.mxu0 0.0
        %816 = vmatpush1.msra.mxu0 0.0
        %817 = vmatprep.subr.mxu0 0.0
        %818 = vmatpush1.msra.mxu0 0.0
        %819 = vmatprep.subr.mxu0 0.0
        %820 = vmatpush1.msra.mxu0 0.0
        %821 = vmatprep.subr.mxu0 0.0
        %822 = vmatpush1.msra.mxu0 0.0
        %823 = vmatprep.subr.mxu0 0.0
        %824 = vmatpush1.msra.mxu0 0.0
        %825 = vmatprep.subr.mxu0 0.0
        %826 = vmatpush1.msra.mxu0 0.0
        %827 = vmatprep.subr.mxu0 0.0
        %828 = vmatpush1.msra.mxu0 0.0
        %829 = vmatprep.subr.mxu0 0.0
        %830 = vmatpush1.msra.mxu0 0.0
        %831 = vmatprep.subr.mxu0 0.0
        %832 = vmatpush1.msra.mxu0 0.0
        %833 = vmatprep.subr.mxu0 0.0
        %834 = vmatpush1.msra.mxu0 0.0
        %835 = vmatprep.subr.mxu0 0.0
        %836 = vmatpush1.msra.mxu0 %v801
        %837 = vmatprep.subr.mxu0 0.0
        %838 = vmatpush2.msra.mxu0 0.0
        %839 = vmatprep.subr.mxu0 0.0
        %840 = vmatpush2.msra.mxu0 0.0
        %841 = vmatprep.subr.mxu0 0.0
        %842 = vmatpush2.msra.mxu0 0.0
        %843 = vmatprep.subr.mxu0 0.0
        %844 = vmatpush2.msra.mxu0 0.0
        %845 = vmatprep.subr.mxu0 0.0
        %846 = vmatpush2.msra.mxu0 0.0
        %847 = vmatprep.subr.mxu0 0.0
        %848 = vmatpush2.msra.mxu0 0.0
        %849 = vmatprep.subr.mxu0 0.0
        %850 = vmatpush2.msra.mxu0 0.0
        %851 = vmatprep.subr.mxu0 0.0
        %852 = vmatpush2.msra.mxu0 0.0
        %853 = vmatprep.subr.mxu0 0.0
        %854 = vmatpush2.msra.mxu0 0.0
        %855 = vmatprep.subr.mxu0 0.0
        %856 = vmatpush2.msra.mxu0 0.0
        %857 = vmatprep.subr.mxu0 0.0
        %858 = vmatpush2.msra.mxu0 0.0
        %859 = vmatprep.subr.mxu0 0.0
        %860 = vmatpush2.msra.mxu0 0.0
        %861 = vmatprep.subr.mxu0 0.0
        %862 = vmatpush2.msra.mxu0 0.0
        %863 = vmatprep.subr.mxu0 0.0
        %864 = vmatpush2.msra.mxu0 0.0
        %865 = vmatprep.subr.mxu0 0.0
        %866 = vmatpush2.msra.mxu0 0.0
        %867 = vmatprep.subr.mxu0 0.0
        %868 = vmatpush2.msra.mxu0 0.0
        %869 = vmatprep.mubr.f32.mxu0 0.0
        %870 = vmatmul.mubr.f32.gmra.mxu0 %v803
        %v871 = vpop.f32.mrf.mxu0
        %v872 = vadd.f32 0.0, %v871
        %v873 = vpop.f32.mrf.mxu0
        %874 = vdwg.mxu0
        %v875 = vadd.f32 %v800, %v872
        %vm876 = vcmask 261120
        %877 = vst.msk [vmem:[#allocation2] sm:$0xff] %vm876, %v875
        %p878 = scmp.eq.s32.totalorder %s39, 3
        // Predicated region
        $region93: #{tpu_custom_call.1} parent=75 // pred_check
          %p879 = pneg %p878
        $region94: #{tpu_custom_call.1} parent=75 // pred_check_branch
          %881 = sbr.rel (%p879) target = $region96
        $region95: #{tpu_custom_call.1} parent=75 // pred_region
          %v882 = vld [vmem:[#allocation2] sm:$0xff]
          %v883 = vld [vmem:[%s5] sm:$0x1]
          %v885 = vlaneseq
          %v886 = vshrl.u32 %v885, 7
          %v887 = vsub.s32 0, %v886
          %v888 = vrot.slane %v883, %v887
          %v890 = vadd.f32 %v882, %v888
          %v891 = vld [vmem:[%s535] sm:$0xff]
          %v892 = vadd.f32 %v890, %v891
          %v893 = vld [vmem:[%s6] sm:$0x1]
          %v894 = vld [vmem:[%s7] sm:$0x1]
          %v895 = vsel %vm876, %v892, 0.0
          %896 = vadd.xlane.f32.xlu0 %v895
          %v897 = vpop.xlane.xlu0 %896
          %v898 = vrcp.pop 32.0
          %v899 = vmul.f32 %v897, %v898
          %v900 = vsub.f32 %v892, %v899
          %v901 = vmul.f32 %v900, %v900
          %v902 = vsel %vm876, %v901, 0.0
          %903 = vadd.xlane.f32.xlu0 %v902
          %v904 = vpop.xlane.xlu0 %903
          %v905 = vmul.f32 %v904, %v898
          %v906 = vadd.f32 %v905, 1e-05
          %v907 = vrsqrt.pop %v906
          %v908 = vmul.f32 %v900, %v907
          %v910 = vlaneseq
          %v911 = vshrl.u32 %v910, 7
          %v912 = vsub.s32 0, %v911
          %v913 = vrot.slane %v893, %v912
          %v915 = vmul.f32 %v908, %v913
          %v917 = vlaneseq
          %v918 = vshrl.u32 %v917, 7
          %v919 = vsub.s32 0, %v918
          %v920 = vrot.slane %v894, %v919
          %v922 = vadd.f32 %v915, %v920
          %v923 = vld [vmem:[#allocation8] sm:$0xff]
          %v924 = vld [vmem:[#allocation8 + $0x8] sm:$0xff]
          %v925 = vld [vmem:[#allocation8 + $0x10] sm:$0xff]
          %v926 = vld [vmem:[#allocation8 + $0x18] sm:$0xff]
          %v927 = vld [vmem:[%s9] sm:$0x1]
          %v929 = vlaneseq
          %v930 = vshrl.u32 %v929, 7
          %v931 = vsub.s32 0, %v930
          %v932 = vrot.slane %v927, %v931
          %v935 = vsel %vm876, %v922, 0
          %937 = vmatprep.subr.mxu0 0.0
          %938 = vmatpush1.msra.mxu0 0.0
          %939 = vmatprep.subr.mxu0 0.0
          %940 = vmatpush1.msra.mxu0 0.0
          %941 = vmatprep.subr.mxu0 0.0
          %942 = vmatpush1.msra.mxu0 0.0
          %943 = vmatprep.subr.mxu0 0.0
          %944 = vmatpush1.msra.mxu0 0.0
          %945 = vmatprep.subr.mxu0 0.0
          %946 = vmatpush1.msra.mxu0 0.0
          %947 = vmatprep.subr.mxu0 0.0
          %948 = vmatpush1.msra.mxu0 0.0
          %949 = vmatprep.subr.mxu0 0.0
          %950 = vmatpush1.msra.mxu0 0.0
          %951 = vmatprep.subr.mxu0 0.0
          %952 = vmatpush1.msra.mxu0 0.0
          %953 = vmatprep.subr.mxu0 0.0
          %954 = vmatpush1.msra.mxu0 0.0
          %955 = vmatprep.subr.mxu0 0.0
          %956 = vmatpush1.msra.mxu0 0.0
          %957 = vmatprep.subr.mxu0 0.0
          %958 = vmatpush1.msra.mxu0 0.0
          %959 = vmatprep.subr.mxu0 0.0
          %960 = vmatpush1.msra.mxu0 0.0
          %961 = vmatprep.subr.mxu0 0.0
          %962 = vmatpush1.msra.mxu0 %v926
          %963 = vmatprep.subr.mxu0 0.0
          %964 = vmatpush1.msra.mxu0 %v925
          %965 = vmatprep.subr.mxu0 0.0
          %966 = vmatpush1.msra.mxu0 %v924
          %967 = vmatprep.subr.mxu0 0.0
          %968 = vmatpush1.msra.mxu0 %v923
          %969 = vmatprep.subr.mxu0 0.0
          %970 = vmatpush2.msra.mxu0 0.0
          %971 = vmatprep.subr.mxu0 0.0
          %972 = vmatpush2.msra.mxu0 0.0
          %973 = vmatprep.subr.mxu0 0.0
          %974 = vmatpush2.msra.mxu0 0.0
          %975 = vmatprep.subr.mxu0 0.0
          %976 = vmatpush2.msra.mxu0 0.0
          %977 = vmatprep.subr.mxu0 0.0
          %978 = vmatpush2.msra.mxu0 0.0
          %979 = vmatprep.subr.mxu0 0.0
          %980 = vmatpush2.msra.mxu0 0.0
          %981 = vmatprep.subr.mxu0 0.0
          %982 = vmatpush2.msra.mxu0 0.0
          %983 = vmatprep.subr.mxu0 0.0
          %984 = vmatpush2.msra.mxu0 0.0
          %985 = vmatprep.subr.mxu0 0.0
          %986 = vmatpush2.msra.mxu0 0.0
          %987 = vmatprep.subr.mxu0 0.0
          %988 = vmatpush2.msra.mxu0 0.0
          %989 = vmatprep.subr.mxu0 0.0
          %990 = vmatpush2.msra.mxu0 0.0
          %991 = vmatprep.subr.mxu0 0.0
          %992 = vmatpush2.msra.mxu0 0.0
          %993 = vmatprep.subr.mxu0 0.0
          %994 = vmatpush2.msra.mxu0 0.0
          %995 = vmatprep.subr.mxu0 0.0
          %996 = vmatpush2.msra.mxu0 0.0
          %997 = vmatprep.subr.mxu0 0.0
          %998 = vmatpush2.msra.mxu0 0.0
          %999 = vmatprep.subr.mxu0 0.0
          %1000 = vmatpush2.msra.mxu0 0.0
          %1001 = vmatprep.mubr.f32.mxu0 0.0
          %1002 = vmatmul.mubr.f32.gmra.mxu0 %v935
          %v1003 = vpop.f32.mrf.mxu0
          %v1004 = vadd.f32 %v932, %v1003
          %v1005 = vpop.f32.mrf.mxu0
          %1006 = vdwg.mxu0
          %v1007 = vmax.f32 %v1004, 0.0
          %v1008 = vld [vmem:[%s10] sm:$0xff]
          %v1009 = vld [vmem:[%s10 + $0x8] sm:$0xff]
          %v1010 = vld [vmem:[%s10 + $0x10] sm:$0xff]
          %v1011 = vld [vmem:[%s10 + $0x18] sm:$0xff]
          %v1012 = vld [vmem:[%s10 + $0x20] sm:$0xff]
          %v1013 = vld [vmem:[%s10 + $0x28] sm:$0xff]
          %v1014 = vld [vmem:[%s10 + $0x30] sm:$0xff]
          %v1015 = vld [vmem:[%s10 + $0x38] sm:$0xff]
          %v1016 = vld [vmem:[%s10 + $0x40] sm:$0xff]
          %v1017 = vld [vmem:[%s10 + $0x48] sm:$0xff]
          %v1018 = vld [vmem:[%s10 + $0x50] sm:$0xff]
          %v1019 = vld [vmem:[%s10 + $0x58] sm:$0xff]
          %v1020 = vld [vmem:[%s10 + $0x60] sm:$0xff]
          %v1021 = vld [vmem:[%s10 + $0x68] sm:$0xff]
          %v1022 = vld [vmem:[%s10 + $0x70] sm:$0xff]
          %v1023 = vld [vmem:[%s10 + $0x78] sm:$0xff]
          %v1024 = vld [vmem:[%s11] sm:$0x1]
          %v1026 = vlaneseq
          %v1027 = vshrl.u32 %v1026, 7
          %v1028 = vsub.s32 0, %v1027
          %v1029 = vrot.slane %v1024, %v1028
          %1031 = vmatprep.subr.mxu0 0.0
          %1032 = vmatpush1.msra.mxu0 %v1023
          %1033 = vmatprep.subr.mxu0 0.0
          %1034 = vmatpush1.msra.mxu0 %v1022
          %1035 = vmatprep.subr.mxu0 0.0
          %1036 = vmatpush1.msra.mxu0 %v1021
          %1037 = vmatprep.subr.mxu0 0.0
          %1038 = vmatpush1.msra.mxu0 %v1020
          %1039 = vmatprep.subr.mxu0 0.0
          %1040 = vmatpush1.msra.mxu0 %v1019
          %1041 = vmatprep.subr.mxu0 0.0
          %1042 = vmatpush1.msra.mxu0 %v1018
          %1043 = vmatprep.subr.mxu0 0.0
          %1044 = vmatpush1.msra.mxu0 %v1017
          %1045 = vmatprep.subr.mxu0 0.0
          %1046 = vmatpush1.msra.mxu0 %v1016
          %1047 = vmatprep.subr.mxu0 0.0
          %1048 = vmatpush1.msra.mxu0 %v1015
          %1049 = vmatprep.subr.mxu0 0.0
          %1050 = vmatpush1.msra.mxu0 %v1014
          %1051 = vmatprep.subr.mxu0 0.0
          %1052 = vmatpush1.msra.mxu0 %v1013
          %1053 = vmatprep.subr.mxu0 0.0
          %1054 = vmatpush1.msra.mxu0 %v1012
          %1055 = vmatprep.subr.mxu0 0.0
          %1056 = vmatpush1.msra.mxu0 %v1011
          %1057 = vmatprep.subr.mxu0 0.0
          %1058 = vmatpush1.msra.mxu0 %v1010
          %1059 = vmatprep.subr.mxu0 0.0
          %1060 = vmatpush1.msra.mxu0 %v1009
          %1061 = vmatprep.subr.mxu0 0.0
          %1062 = vmatpush1.msra.mxu0 %v1008
          %1063 = vmatprep.subr.mxu0 0.0
          %1064 = vmatpush2.msra.mxu0 0.0
          %1065 = vmatprep.subr.mxu0 0.0
          %1066 = vmatpush2.msra.mxu0 0.0
          %1067 = vmatprep.subr.mxu0 0.0
          %1068 = vmatpush2.msra.mxu0 0.0
          %1069 = vmatprep.subr.mxu0 0.0
          %1070 = vmatpush2.msra.mxu0 0.0
          %1071 = vmatprep.subr.mxu0 0.0
          %1072 = vmatpush2.msra.mxu0 0.0
          %1073 = vmatprep.subr.mxu0 0.0
          %1074 = vmatpush2.msra.mxu0 0.0
          %1075 = vmatprep.subr.mxu0 0.0
          %1076 = vmatpush2.msra.mxu0 0.0
          %1077 = vmatprep.subr.mxu0 0.0
          %1078 = vmatpush2.msra.mxu0 0.0
          %1079 = vmatprep.subr.mxu0 0.0
          %1080 = vmatpush2.msra.mxu0 0.0
          %1081 = vmatprep.subr.mxu0 0.0
          %1082 = vmatpush2.msra.mxu0 0.0
          %1083 = vmatprep.subr.mxu0 0.0
          %1084 = vmatpush2.msra.mxu0 0.0
          %1085 = vmatprep.subr.mxu0 0.0
          %1086 = vmatpush2.msra.mxu0 0.0
          %1087 = vmatprep.subr.mxu0 0.0
          %1088 = vmatpush2.msra.mxu0 0.0
          %1089 = vmatprep.subr.mxu0 0.0
          %1090 = vmatpush2.msra.mxu0 0.0
          %1091 = vmatprep.subr.mxu0 0.0
          %1092 = vmatpush2.msra.mxu0 0.0
          %1093 = vmatprep.subr.mxu0 0.0
          %1094 = vmatpush2.msra.mxu0 0.0
          %1095 = vmatprep.mubr.f32.mxu0 0.0
          %1096 = vmatmul.mubr.f32.gmra.mxu0 %v1007
          %v1097 = vpop.f32.mrf.mxu0
          %v1098 = vadd.f32 %v1029, %v1097
          %v1099 = vpop.f32.mrf.mxu0
          %1100 = vdwg.mxu0
          %v1101 = vadd.f32 %v1098, %v922
          %v1102 = vld [vmem:[%s12] sm:$0x1]
          %v1103 = vld [vmem:[%s13] sm:$0x1]
          %v1104 = vsel %vm876, %v1101, 0.0
          %1105 = vadd.xlane.f32.xlu0 %v1104
          %v1106 = vpop.xlane.xlu0 %1105
          %v1107 = vmul.f32 %v1106, %v898
          %v1108 = vsub.f32 %v1101, %v1107
          %v1109 = vmul.f32 %v1108, %v1108
          %v1110 = vsel %vm876, %v1109, 0.0
          %1111 = vadd.xlane.f32.xlu0 %v1110
          %v1112 = vpop.xlane.xlu0 %1111
          %v1113 = vmul.f32 %v1112, %v898
          %v1114 = vadd.f32 %v1113, 1e-05
          %v1115 = vrsqrt.pop %v1114
          %v1116 = vmul.f32 %v1108, %v1115
          %v1118 = vlaneseq
          %v1119 = vshrl.u32 %v1118, 7
          %v1120 = vsub.s32 0, %v1119
          %v1121 = vrot.slane %v1102, %v1120
          %v1123 = vmul.f32 %v1116, %v1121
          %v1125 = vlaneseq
          %v1126 = vshrl.u32 %v1125, 7
          %v1127 = vsub.s32 0, %v1126
          %v1128 = vrot.slane %v1103, %v1127
          %v1130 = vadd.f32 %v1123, %v1128
          %1131 = vst.msk [vmem:[%s608] sm:$0xff] %vm876, %v1130
        $region96: #{tpu_custom_call.1} parent=75 // pred_fallthru
          _
        %s1132 = sand.u32 %s379, 1
        %s1133 = scalar_lea.sflag [#allocation5], %s1132
        %s1134 = sand.u32 %s379, 1
        %s1135 = smul.addr %s1134, 8
        %s1136 = scalar_lea.vmem [#allocation9], %s1135
        // Predicated region
        $region97: #{tpu_custom_call.1} parent=75 // pred_check
          %p1137 = pneg %p389
        $region98: #{tpu_custom_call.1} parent=75 // pred_check_branch
          %1139 = sbr.rel (%p1137) target = $region100
        $region99: #{tpu_custom_call.1} parent=75 // pred_region
          %s1141 = ssub.s32 128, 128
          %1142 = vsyncadd %s1133, %s1141
          %s1143 = smul.addr %s38, 128
          %s1144 = scalar_lea.hbm %s14, %s1143
          %s1146 = sshll.u32 %s1136, 4
          %s1147 = int_to_ptr.vmem [resolvable:$true] %s1146
          %1149 = dma.vmem_to_hbm [thread:$0]  %s1147, 128, %s1144, %s1133
        $region100: #{tpu_custom_call.1} parent=75 // pred_fallthru
          _
      $region76: #{tpu_custom_call.1} parent=5 // pred_fallthru
        _
      %p1150 = scmp.le.s32.totalorder 2, %s29
      // Predicated region
      $region101: #{tpu_custom_call.1} parent=5 // pred_check
        %p1151 = pneg %p1150
      $region102: #{tpu_custom_call.1} parent=5 // pred_check_branch
        %1153 = sbr.rel (%p1151) target = $region104
      $region103: #{tpu_custom_call.1} parent=5 // pred_region
        %s1154 = ssub.s32 %s29, 2
        // Predicated region
        $region105: #{tpu_custom_call.1} parent=103 // pred_check
          %p1155 = pneg %p395
        $region106: #{tpu_custom_call.1} parent=103 // pred_check_branch
          %1157 = sbr.rel (%p1155) target = $region108
        $region107: #{tpu_custom_call.1} parent=103 // pred_region
          %s1158 = sand.u32 %s380, 1
          %s1159 = scalar_lea.sflag [#allocation5], %s1158
          %s1160 = sand.u32 %s380, 1
          %s1161 = smul.addr %s1160, 8
          %s1162 = scalar_lea.vmem [#allocation9], %s1161
          %1163 = dma.done %s1159, 128
        $region108: #{tpu_custom_call.1} parent=103 // pred_fallthru
          _
      $region104: #{tpu_custom_call.1} parent=5 // pred_fallthru
        _
    $region6: #{tpu_custom_call.1} parent=1 // loop_footer
      %s33 = sadd.s32 1, %s29
    $region7: #{tpu_custom_call.1} parent=1 // loop_footer_branch
      %28 = sbr.rel target = $region3
    $region8: #{tpu_custom_call.1} parent=1 // loop_exit
      _
    %1164 = vsyncpa [#allocation4], 1
    %s1165 = scalar_lea.sflag [#allocation4], 1
    %1166 = vsyncpa %s1165, 1
    %1167 = vsyncpa [#allocation7], 1
    %s1168 = scalar_lea.sflag [#allocation7], 1
    %1169 = vsyncpa %s1168, 1
    %1170 = vsyncpa [#allocation5], 1
    %s1171 = scalar_lea.sflag [#allocation5], 1
    %1172 = vsyncpa %s1171, 1

// kernel: tpu_custom_call.1
$region0: #{tpu_custom_call.1}
  #allocation0 [shape = 'u32[]', space=smem, size = 0x4, offset = 0x4, fixed_abs, tag = 'smem constant byte address 0x4 - core index']
  #allocation1 [shape = 'u32[144,128]{1,0:T(1,128)}', space=vmem, size = 0x12000, scoped, tag = 'internal scratch']
  #allocation2 [shape = 'f32[8,32]{1,0:T(8,128)}', space=vmem, size = 0x1000, scoped, tag = 'scratch operand']
  %s0 = inlined_call_operand.vmem [shape: f32[2,4,8,8], index: 0, kind: input, shape index: {}]
  %s1 = inlined_call_operand.vmem [shape: f32[2,4,8,8], index: 1, kind: input, shape index: {}]
  %s2 = inlined_call_operand.hbm [shape: f32[2,4,8,8], index: 2, kind: input, shape index: {}]
  %s3 = inlined_call_operand.hbm [shape: f32[2,8,32], index: 3, kind: input, shape index: {}]
  %s4 = inlined_call_operand.vmem [shape: f32[32,32], index: 4, kind: input, shape index: {}]
  %s5 = inlined_call_operand.vmem [shape: f32[1,32], index: 5, kind: input, shape index: {}]
  %s6 = inlined_call_operand.vmem [shape: f32[1,32], index: 6, kind: input, shape index: {}]
  %s7 = inlined_call_operand.vmem [shape: f32[1,32], index: 7, kind: input, shape index: {}]
  %s8 = inlined_call_operand.hbm [shape: f32[32,128], index: 8, kind: input, shape index: {}]
  %s9 = inlined_call_operand.vmem [shape: f32[1,128], index: 9, kind: input, shape index: {}]
  %s10 = inlined_call_operand.vmem [shape: f32[128,32], index: 10, kind: input, shape index: {}]
  %s11 = inlined_call_operand.vmem [shape: f32[1,32], index: 11, kind: input, shape index: {}]
  %s12 = inlined_call_operand.vmem [shape: f32[1,32], index: 12, kind: input, shape index: {}]
  %s13 = inlined_call_operand.vmem [shape: f32[1,32], index: 13, kind: input, shape index: {}]
  %s14 = inlined_call_operand.hbm [shape: f32[2,8,32], index: 14, kind: output, shape index: {}]
  %s15 = sld [smem:[#allocation0]]
  $region109: #{tpu_custom_call.1} parent=0
    _
  %s17 = ssub.s32 1, %s15
  %s18 = scalar_select 0, %s17, %s15
  $region1: #{tpu_custom_call.1} parent=0
    #allocation3 [shape = 'u8[8192]{0}', space=vmem, size = 0x2000, scoped, tag = 'input window, operand 2']
    #allocation4 [shape = 's32[2]{0}', space=sflag, size = 0x8, scoped, tag = 'scoped memory for tpu_custom_call.1']
    #allocation5 [shape = 's32[2]{0}', space=sflag, size = 0x8, scoped, tag = 'scoped memory for tpu_custom_call.1']
    #allocation6 [shape = 'u8[8192]{0}', space=vmem, size = 0x2000, scoped, tag = 'input window, operand 3']
    #allocation7 [shape = 's32[2]{0}', space=sflag, size = 0x8, scoped, tag = 'scoped memory for tpu_custom_call.1']
    #allocation8 [shape = 'u8[16384]{0}', space=vmem, size = 0x4000, scoped, tag = 'input window, operand 8, single buffered']
    #allocation9 [shape = 'u8[8192]{0}', space=vmem, size = 0x2000, scoped, tag = 'output window, operand 0']
    %19 = vsyncpa [#allocation4], 0
    %s20 = scalar_lea.sflag [#allocation4], 1
    %21 = vsyncpa %s20, 0
    %22 = vsyncpa [#allocation7], 0
    %s23 = scalar_lea.sflag [#allocation7], 1
    %24 = vsyncpa %s23, 0
    %25 = vsyncpa [#allocation5], 0
    %s26 = scalar_lea.sflag [#allocation5], 1
    %27 = vsyncpa %s26, 0
    loop: start=0, step=1, limit=10
    $region2: #{tpu_custom_call.1} parent=1 // loop_pre_header
      _
    $region3: #{tpu_custom_call.1} parent=1 // loop_header
      %s29 = sphi 0, %s33
      %p30 = scmp.ge.s32.totalorder %s29, 10
      %s36 = sphi 0, %s48
      %s37 = sphi 0, %s44
      %s38 = sphi 0, %s36
      %s39 = sphi 0, %s37
      %s40 = sphi 0, %s38
      %s41 = sphi 0, %s39
      %s53 = sphi 0, %s55
      %s56 = sphi 0, %s53
      %s57 = sphi 0, %s56
      %s73 = sphi 0, %s57
      %s81 = sphi 0, %s83
      %s84 = sphi 0, %s81
      %s85 = sphi 0, %s84
      %s101 = sphi 0, %s85
      %s109 = sphi 0, %s111
      %s112 = sphi 0, %s109
      %s113 = sphi 0, %s112
      %s129 = sphi 0, %s113
      %s135 = sphi 0, %s137
      %s138 = sphi 0, %s135
      %s139 = sphi 0, %s138
      %s155 = sphi 0, %s139
      %s161 = sphi 0, %s163
      %s164 = sphi 0, %s161
      %s165 = sphi 0, %s164
      %s181 = sphi 0, %s165
      %s185 = sphi 0, %s185
      %s187 = sphi 0, %s185
      %s188 = sphi 0, %s187
      %s202 = sphi 0, %s188
      %s206 = sphi 0, %s206
      %s208 = sphi 0, %s206
      %s209 = sphi 0, %s208
      %s223 = sphi 0, %s209
      %s227 = sphi 0, %s227
      %s229 = sphi 0, %s227
      %s230 = sphi 0, %s229
      %s244 = sphi 0, %s230
      %s248 = sphi 0, %s248
      %s250 = sphi 0, %s248
      %s251 = sphi 0, %s250
      %s265 = sphi 0, %s251
      %s269 = sphi 0, %s269
      %s271 = sphi 0, %s269
      %s272 = sphi 0, %s271
      %s286 = sphi 0, %s272
      %s290 = sphi 0, %s290
      %s292 = sphi 0, %s290
      %s293 = sphi 0, %s292
      %s307 = sphi 0, %s293
      %s311 = sphi 0, %s311
      %s313 = sphi 0, %s311
      %s314 = sphi 0, %s313
      %s328 = sphi 0, %s314
      %s332 = sphi 0, %s332
      %s334 = sphi 0, %s332
      %s335 = sphi 0, %s334
      %s349 = sphi 0, %s335
      %s353 = sphi 0, %s353
      %s355 = sphi 0, %s353
      %s356 = sphi 0, %s355
      %s370 = sphi 0, %s356
      %s376 = sphi 0, %s378
      %s379 = sphi 0, %s376
      %s380 = sphi 0, %s379
      %s396 = sphi 0, %s380
    $region4: #{tpu_custom_call.1} parent=1 // loop_header_branch
      %32 = sbr.rel (%p30) target = $region8
    $region5: #{tpu_custom_call.1} parent=1 // loop_body
      %s34 = ssub.s32 %s29, 1
      %s35 = ssub.s32 %s29, 2
      %s42 = sadd.s32 1, %s37
      %p43 = scmp.ge.s32.totalorder %s42, 4
      %s44 = scalar_select %p43, 0, %s42
      %s45 = sadd.s32 1, %s36
      %s46 = scalar_select %p43, %s45, %s36
      %p47 = scmp.ge.s32.totalorder %s46, 2
      %s48 = scalar_select %p47, 0, %s46
      %s49 = ssub.s32 %s36, %s48
      %s50 = ssub.s32 %s37, %s44
      %s51 = sor.u32 %s49, %s50
      %p52 = scmp.eq.s32.totalorder %s51, 0
      %s54 = sadd.s32 %s53, 1
      %s55 = scalar_select %p52, %s53, %s54
      %p58 = pneg %p52
      %p59 = scmp.eq.s32.totalorder %s29, 7
      %p60 = por %p58, %p59
      %p61 = scmp.ne.s32.totalorder %s53, %s56
      %p62 = scmp.eq.s32.totalorder %s29, 0
      %p63 = por %p61, %p62
      %p64 = scmp.ne.s32.totalorder %s53, %s56
      %p65 = scmp.eq.s32.totalorder %s34, 7
      %p66 = por %p64, %p65
      %p67 = scmp.ne.s32.totalorder %s56, %s57
      %p68 = scmp.eq.s32.totalorder %s34, 0
      %p69 = por %p67, %p68
      %p70 = scmp.ne.s32.totalorder %s56, %s57
      %p71 = scmp.eq.s32.totalorder %s35, 7
      %p72 = por %p70, %p71
      %p74 = scmp.ne.s32.totalorder %s57, %s73
      %p75 = scmp.eq.s32.totalorder %s35, 0
      %p76 = por %p74, %p75
      %s77 = ssub.s32 %s36, %s48
      %s78 = ssub.s32 %s37, %s44
      %s79 = sor.u32 %s77, %s78
      %p80 = scmp.eq.s32.totalorder %s79, 0
      %s82 = sadd.s32 %s81, 1
      %s83 = scalar_select %p80, %s81, %s82
      %p86 = pneg %p80
      %p87 = scmp.eq.s32.totalorder %s29, 7
      %p88 = por %p86, %p87
      %p89 = scmp.ne.s32.totalorder %s81, %s84
      %p90 = scmp.eq.s32.totalorder %s29, 0
      %p91 = por %p89, %p90
      %p92 = scmp.ne.s32.totalorder %s81, %s84
      %p93 = scmp.eq.s32.totalorder %s34, 7
      %p94 = por %p92, %p93
      %p95 = scmp.ne.s32.totalorder %s84, %s85
      %p96 = scmp.eq.s32.totalorder %s34, 0
      %p97 = por %p95, %p96
      %p98 = scmp.ne.s32.totalorder %s84, %s85
      %p99 = scmp.eq.s32.totalorder %s35, 7
      %p100 = por %p98, %p99
      %p102 = scmp.ne.s32.totalorder %s85, %s101
      %p103 = scmp.eq.s32.totalorder %s35, 0
      %p104 = por %p102, %p103
      %s105 = ssub.s32 %s36, %s48
      %s106 = ssub.s32 %s37, %s44
      %s107 = sor.u32 %s105, %s106
      %p108 = scmp.eq.s32.totalorder %s107, 0
      %s110 = sadd.s32 %s109, 1
      %s111 = scalar_select %p108, %s109, %s110
      %p114 = pneg %p108
      %p115 = scmp.eq.s32.totalorder %s29, 7
      %p116 = por %p114, %p115
      %p117 = scmp.ne.s32.totalorder %s109, %s112
      %p118 = scmp.eq.s32.totalorder %s29, 0
      %p119 = por %p117, %p118
      %p120 = scmp.ne.s32.totalorder %s109, %s112
      %p121 = scmp.eq.s32.totalorder %s34, 7
      %p122 = por %p120, %p121
      %p123 = scmp.ne.s32.totalorder %s112, %s113
      %p124 = scmp.eq.s32.totalorder %s34, 0
      %p125 = por %p123, %p124
      %p126 = scmp.ne.s32.totalorder %s112, %s113
      %p127 = scmp.eq.s32.totalorder %s35, 7
      %p128 = por %p126, %p127
      %p130 = scmp.ne.s32.totalorder %s113, %s129
      %p131 = scmp.eq.s32.totalorder %s35, 0
      %p132 = por %p130, %p131
      %s133 = ssub.s32 %s36, %s48
      %p134 = scmp.eq.s32.totalorder %s133, 0
      %s136 = sadd.s32 %s135, 1
      %s137 = scalar_select %p134, %s135, %s136
      %p140 = pneg %p134
      %p141 = scmp.eq.s32.totalorder %s29, 7
      %p142 = por %p140, %p141
      %p143 = scmp.ne.s32.totalorder %s135, %s138
      %p144 = scmp.eq.s32.totalorder %s29, 0
      %p145 = por %p143, %p144
      %p146 = scmp.ne.s32.totalorder %s135, %s138
      %p147 = scmp.eq.s32.totalorder %s34, 7
      %p148 = por %p146, %p147
      %p149 = scmp.ne.s32.totalorder %s138, %s139
      %p150 = scmp.eq.s32.totalorder %s34, 0
      %p151 = por %p149, %p150
      %p152 = scmp.ne.s32.totalorder %s138, %s139
      %p153 = scmp.eq.s32.totalorder %s35, 7
      %p154 = por %p152, %p153
      %p156 = scmp.ne.s32.totalorder %s139, %s155
      %p157 = scmp.eq.s32.totalorder %s35, 0
      %p158 = por %p156, %p157
      %s159 = ssub.s32 %s37, %s44
      %p160 = scmp.eq.s32.totalorder %s159, 0
      %s162 = sadd.s32 %s161, 1
      %s163 = scalar_select %p160, %s161, %s162
      %p166 = pneg %p160
      %p167 = scmp.eq.s32.totalorder %s29, 7
      %p168 = por %p166, %p167
      %p169 = scmp.ne.s32.totalorder %s161, %s164
      %p170 = scmp.eq.s32.totalorder %s29, 0
      %p171 = por %p169, %p170
      %p172 = scmp.ne.s32.totalorder %s161, %s164
      %p173 = scmp.eq.s32.totalorder %s34, 7
      %p174 = por %p172, %p173
      %p175 = scmp.ne.s32.totalorder %s164, %s165
      %p176 = scmp.eq.s32.totalorder %s34, 0
      %p177 = por %p175, %p176
      %p178 = scmp.ne.s32.totalorder %s164, %s165
      %p179 = scmp.eq.s32.totalorder %s35, 7
      %p180 = por %p178, %p179
      %p182 = scmp.ne.s32.totalorder %s165, %s181
      %p183 = scmp.eq.s32.totalorder %s35, 0
      %p184 = por %p182, %p183
      %s186 = sadd.s32 %s185, 1
      %p189 = scmp.eq.s32.totalorder %s29, 7
      %p190 = scmp.ne.s32.totalorder %s185, %s187
      %p191 = scmp.eq.s32.totalorder %s29, 0
      %p192 = por %p190, %p191
      %p193 = scmp.ne.s32.totalorder %s185, %s187
      %p194 = scmp.eq.s32.totalorder %s34, 7
      %p195 = por %p193, %p194
      %p196 = scmp.ne.s32.totalorder %s187, %s188
      %p197 = scmp.eq.s32.totalorder %s34, 0
      %p198 = por %p196, %p197
      %p199 = scmp.ne.s32.totalorder %s187, %s188
      %p200 = scmp.eq.s32.totalorder %s35, 7
      %p201 = por %p199, %p200
      %p203 = scmp.ne.s32.totalorder %s188, %s202
      %p204 = scmp.eq.s32.totalorder %s35, 0
      %p205 = por %p203, %p204
      %s207 = sadd.s32 %s206, 1
      %p210 = scmp.eq.s32.totalorder %s29, 7
      %p211 = scmp.ne.s32.totalorder %s206, %s208
      %p212 = scmp.eq.s32.totalorder %s29, 0
      %p213 = por %p211, %p212
      %p214 = scmp.ne.s32.totalorder %s206, %s208
      %p215 = scmp.eq.s32.totalorder %s34, 7
      %p216 = por %p214, %p215
      %p217 = scmp.ne.s32.totalorder %s208, %s209
      %p218 = scmp.eq.s32.totalorder %s34, 0
      %p219 = por %p217, %p218
      %p220 = scmp.ne.s32.totalorder %s208, %s209
      %p221 = scmp.eq.s32.totalorder %s35, 7
      %p222 = por %p220, %p221
      %p224 = scmp.ne.s32.totalorder %s209, %s223
      %p225 = scmp.eq.s32.totalorder %s35, 0
      %p226 = por %p224, %p225
      %s228 = sadd.s32 %s227, 1
      %p231 = scmp.eq.s32.totalorder %s29, 7
      %p232 = scmp.ne.s32.totalorder %s227, %s229
      %p233 = scmp.eq.s32.totalorder %s29, 0
      %p234 = por %p232, %p233
      %p235 = scmp.ne.s32.totalorder %s227, %s229
      %p236 = scmp.eq.s32.totalorder %s34, 7
      %p237 = por %p235, %p236
      %p238 = scmp.ne.s32.totalorder %s229, %s230
      %p239 = scmp.eq.s32.totalorder %s34, 0
      %p240 = por %p238, %p239
      %p241 = scmp.ne.s32.totalorder %s229, %s230
      %p242 = scmp.eq.s32.totalorder %s35, 7
      %p243 = por %p241, %p242
      %p245 = scmp.ne.s32.totalorder %s230, %s244
      %p246 = scmp.eq.s32.totalorder %s35, 0
      %p247 = por %p245, %p246
      %s249 = sadd.s32 %s248, 1
      %p252 = scmp.eq.s32.totalorder %s29, 7
      %p253 = scmp.ne.s32.totalorder %s248, %s250
      %p254 = scmp.eq.s32.totalorder %s29, 0
      %p255 = por %p253, %p254
      %p256 = scmp.ne.s32.totalorder %s248, %s250
      %p257 = scmp.eq.s32.totalorder %s34, 7
      %p258 = por %p256, %p257
      %p259 = scmp.ne.s32.totalorder %s250, %s251
      %p260 = scmp.eq.s32.totalorder %s34, 0
      %p261 = por %p259, %p260
      %p262 = scmp.ne.s32.totalorder %s250, %s251
      %p263 = scmp.eq.s32.totalorder %s35, 7
      %p264 = por %p262, %p263
      %p266 = scmp.ne.s32.totalorder %s251, %s265
      %p267 = scmp.eq.s32.totalorder %s35, 0
      %p268 = por %p266, %p267
      %s270 = sadd.s32 %s269, 1
      %p273 = scmp.eq.s32.totalorder %s29, 7
      %p274 = scmp.ne.s32.totalorder %s269, %s271
      %p275 = scmp.eq.s32.totalorder %s29, 0
      %p276 = por %p274, %p275
      %p277 = scmp.ne.s32.totalorder %s269, %s271
      %p278 = scmp.eq.s32.totalorder %s34, 7
      %p279 = por %p277, %p278
      %p280 = scmp.ne.s32.totalorder %s271, %s272
      %p281 = scmp.eq.s32.totalorder %s34, 0
      %p282 = por %p280, %p281
      %p283 = scmp.ne.s32.totalorder %s271, %s272
      %p284 = scmp.eq.s32.totalorder %s35, 7
      %p285 = por %p283, %p284
      %p287 = scmp.ne.s32.totalorder %s272, %s286
      %p288 = scmp.eq.s32.totalorder %s35, 0
      %p289 = por %p287, %p288
      %s291 = sadd.s32 %s290, 1
      %p294 = scmp.eq.s32.totalorder %s29, 7
      %p295 = scmp.ne.s32.totalorder %s290, %s292
      %p296 = scmp.eq.s32.totalorder %s29, 0
      %p297 = por %p295, %p296
      %p298 = scmp.ne.s32.totalorder %s290, %s292
      %p299 = scmp.eq.s32.totalorder %s34, 7
      %p300 = por %p298, %p299
      %p301 = scmp.ne.s32.totalorder %s292, %s293
      %p302 = scmp.eq.s32.totalorder %s34, 0
      %p303 = por %p301, %p302
      %p304 = scmp.ne.s32.totalorder %s292, %s293
      %p305 = scmp.eq.s32.totalorder %s35, 7
      %p306 = por %p304, %p305
      %p308 = scmp.ne.s32.totalorder %s293, %s307
      %p309 = scmp.eq.s32.totalorder %s35, 0
      %p310 = por %p308, %p309
      %s312 = sadd.s32 %s311, 1
      %p315 = scmp.eq.s32.totalorder %s29, 7
      %p316 = scmp.ne.s32.totalorder %s311, %s313
      %p317 = scmp.eq.s32.totalorder %s29, 0
      %p318 = por %p316, %p317
      %p319 = scmp.ne.s32.totalorder %s311, %s313
      %p320 = scmp.eq.s32.totalorder %s34, 7
      %p321 = por %p319, %p320
      %p322 = scmp.ne.s32.totalorder %s313, %s314
      %p323 = scmp.eq.s32.totalorder %s34, 0
      %p324 = por %p322, %p323
      %p325 = scmp.ne.s32.totalorder %s313, %s314
      %p326 = scmp.eq.s32.totalorder %s35, 7
      %p327 = por %p325, %p326
      %p329 = scmp.ne.s32.totalorder %s314, %s328
      %p330 = scmp.eq.s32.totalorder %s35, 0
      %p331 = por %p329, %p330
      %s333 = sadd.s32 %s332, 1
      %p336 = scmp.eq.s32.totalorder %s29, 7
      %p337 = scmp.ne.s32.totalorder %s332, %s334
      %p338 = scmp.eq.s32.totalorder %s29, 0
      %p339 = por %p337, %p338
      %p340 = scmp.ne.s32.totalorder %s332, %s334
      %p341 = scmp.eq.s32.totalorder %s34, 7
      %p342 = por %p340, %p341
      %p343 = scmp.ne.s32.totalorder %s334, %s335
      %p344 = scmp.eq.s32.totalorder %s34, 0
      %p345 = por %p343, %p344
      %p346 = scmp.ne.s32.totalorder %s334, %s335
      %p347 = scmp.eq.s32.totalorder %s35, 7
      %p348 = por %p346, %p347
      %p350 = scmp.ne.s32.totalorder %s335, %s349
      %p351 = scmp.eq.s32.totalorder %s35, 0
      %p352 = por %p350, %p351
      %s354 = sadd.s32 %s353, 1
      %p357 = scmp.eq.s32.totalorder %s29, 7
      %p358 = scmp.ne.s32.totalorder %s353, %s355
      %p359 = scmp.eq.s32.totalorder %s29, 0
      %p360 = por %p358, %p359
      %p361 = scmp.ne.s32.totalorder %s353, %s355
      %p362 = scmp.eq.s32.totalorder %s34, 7
      %p363 = por %p361, %p362
      %p364 = scmp.ne.s32.totalorder %s355, %s356
      %p365 = scmp.eq.s32.totalorder %s34, 0
      %p366 = por %p364, %p365
      %p367 = scmp.ne.s32.totalorder %s355, %s356
      %p368 = scmp.eq.s32.totalorder %s35, 7
      %p369 = por %p367, %p368
      %p371 = scmp.ne.s32.totalorder %s356, %s370
      %p372 = scmp.eq.s32.totalorder %s35, 0
      %p373 = por %p371, %p372
      %s374 = ssub.s32 %s36, %s48
      %p375 = scmp.eq.s32.totalorder %s374, 0
      %s377 = sadd.s32 %s376, 1
      %s378 = scalar_select %p375, %s376, %s377
      %p381 = pneg %p375
      %p382 = scmp.eq.s32.totalorder %s29, 7
      %p383 = por %p381, %p382
      %p384 = scmp.ne.s32.totalorder %s376, %s379
      %p385 = scmp.eq.s32.totalorder %s29, 0
      %p386 = por %p384, %p385
      %p387 = scmp.ne.s32.totalorder %s376, %s379
      %p388 = scmp.eq.s32.totalorder %s34, 7
      %p389 = por %p387, %p388
      %p390 = scmp.ne.s32.totalorder %s379, %s380
      %p391 = scmp.eq.s32.totalorder %s34, 0
      %p392 = por %p390, %p391
      %p393 = scmp.ne.s32.totalorder %s379, %s380
      %p394 = scmp.eq.s32.totalorder %s35, 7
      %p395 = por %p393, %p394
      %p397 = scmp.ne.s32.totalorder %s380, %s396
      %p398 = scmp.eq.s32.totalorder %s35, 0
      %p399 = por %p397, %p398
      %p400 = scmp.le.s32.totalorder 1, %s29
      %p401 = scmp.lt.s32.totalorder %s29, 9
      %p402 = pnand %p400, %p401
      %p403 = pneg %p402
      // Predicated region
      $region9: #{tpu_custom_call.1} parent=5 // pred_check
        _
      $region10: #{tpu_custom_call.1} parent=5 // pred_check_branch
        %405 = sbr.rel (%p402) target = $region12
      $region11: #{tpu_custom_call.1} parent=5 // pred_region
        %s406 = ssub.s32 %s29, 1
        // Predicated region
        $region13: #{tpu_custom_call.1} parent=11 // pred_check
          %p407 = pneg %p198
        $region14: #{tpu_custom_call.1} parent=11 // pred_check_branch
          %409 = sbr.rel (%p407) target = $region16
        $region15: #{tpu_custom_call.1} parent=11 // pred_region
          _
        $region16: #{tpu_custom_call.1} parent=11 // pred_fallthru
          _
        // Predicated region
        $region17: #{tpu_custom_call.1} parent=11 // pred_check
          %p410 = pneg %p219
        $region18: #{tpu_custom_call.1} parent=11 // pred_check_branch
          %412 = sbr.rel (%p410) target = $region20
        $region19: #{tpu_custom_call.1} parent=11 // pred_region
          _
        $region20: #{tpu_custom_call.1} parent=11 // pred_fallthru
          _
        // Predicated region
        $region21: #{tpu_custom_call.1} parent=11 // pred_check
          %p413 = pneg %p240
        $region22: #{tpu_custom_call.1} parent=11 // pred_check_branch
          %415 = sbr.rel (%p413) target = $region24
        $region23: #{tpu_custom_call.1} parent=11 // pred_region
          _
        $region24: #{tpu_custom_call.1} parent=11 // pred_fallthru
          _
        // Predicated region
        $region25: #{tpu_custom_call.1} parent=11 // pred_check
          %p416 = pneg %p261
        $region26: #{tpu_custom_call.1} parent=11 // pred_check_branch
          %418 = sbr.rel (%p416) target = $region28
        $region27: #{tpu_custom_call.1} parent=11 // pred_region
          %s420 = ssub.s32 512, 512
          %421 = vsyncadd [#allocation7], %s420
          %s422 = sshll.u32 [#allocation8], 4
          %s423 = int_to_ptr.vmem [resolvable:$true] %s422
          %428 = dma.hbm_to_vmem [thread:$0]  %s8, 512, %s423, [#allocation7], 128, 128, 8
        $region28: #{tpu_custom_call.1} parent=11 // pred_fallthru
          _
        // Predicated region
        $region29: #{tpu_custom_call.1} parent=11 // pred_check
          %p429 = pneg %p282
        $region30: #{tpu_custom_call.1} parent=11 // pred_check_branch
          %431 = sbr.rel (%p429) target = $region32
        $region31: #{tpu_custom_call.1} parent=11 // pred_region
          _
        $region32: #{tpu_custom_call.1} parent=11 // pred_fallthru
          _
        // Predicated region
        $region33: #{tpu_custom_call.1} parent=11 // pred_check
          %p432 = pneg %p303
        $region34: #{tpu_custom_call.1} parent=11 // pred_check_branch
          %434 = sbr.rel (%p432) target = $region36
        $region35: #{tpu_custom_call.1} parent=11 // pred_region
          _
        $region36: #{tpu_custom_call.1} parent=11 // pred_fallthru
          _
        // Predicated region
        $region37: #{tpu_custom_call.1} parent=11 // pred_check
          %p435 = pneg %p324
        $region38: #{tpu_custom_call.1} parent=11 // pred_check_branch
          %437 = sbr.rel (%p435) target = $region40
        $region39: #{tpu_custom_call.1} parent=11 // pred_region
          _
        $region40: #{tpu_custom_call.1} parent=11 // pred_fallthru
          _
        // Predicated region
        $region41: #{tpu_custom_call.1} parent=11 // pred_check
          %p438 = pneg %p345
        $region42: #{tpu_custom_call.1} parent=11 // pred_check_branch
          %440 = sbr.rel (%p438) target = $region44
        $region43: #{tpu_custom_call.1} parent=11 // pred_region
          _
        $region44: #{tpu_custom_call.1} parent=11 // pred_fallthru
          _
        // Predicated region
        $region45: #{tpu_custom_call.1} parent=11 // pred_check
          %p441 = pneg %p366
        $region46: #{tpu_custom_call.1} parent=11 // pred_check_branch
          %443 = sbr.rel (%p441) target = $region48
        $region47: #{tpu_custom_call.1} parent=11 // pred_region
          _
        $region48: #{tpu_custom_call.1} parent=11 // pred_fallthru
          _
      $region12: #{tpu_custom_call.1} parent=5 // pred_fallthru
        _
      %p444 = scmp.lt.s32.totalorder %s29, 8
      // Predicated region
      $region49: #{tpu_custom_call.1} parent=5 // pred_check
        %p445 = pneg %p444
      $region50: #{tpu_custom_call.1} parent=5 // pred_check_branch
        %447 = sbr.rel (%p445) target = $region52
      $region51: #{tpu_custom_call.1} parent=5 // pred_region
        // Predicated region
        $region53: #{tpu_custom_call.1} parent=51 // pred_check
          %p448 = pneg %p63
        $region54: #{tpu_custom_call.1} parent=51 // pred_check_branch
          %450 = sbr.rel (%p448) target = $region56
        $region55: #{tpu_custom_call.1} parent=51 // pred_region
          %p451 = scmp.lt.s32.totalorder %s36, 1
          %s452 = scalar_select %p451, %s36, 1
          %p453 = scmp.lt.s32.totalorder %s37, 3
          %s454 = scalar_select %p453, %s37, 3
          %s455 = smul.addr %s452, 4
          %s456 = sadd.s32 %s454, %s455
          %s457 = smul.addr %s456, 8
          %s458 = scalar_lea.vmem %s0, %s457
        $region56: #{tpu_custom_call.1} parent=51 // pred_fallthru
          _
        // Predicated region
        $region57: #{tpu_custom_call.1} parent=51 // pred_check
          %p459 = pneg %p91
        $region58: #{tpu_custom_call.1} parent=51 // pred_check_branch
          %461 = sbr.rel (%p459) target = $region60
        $region59: #{tpu_custom_call.1} parent=51 // pred_region
          %p462 = scmp.lt.s32.totalorder %s36, 1
          %s463 = scalar_select %p462, %s36, 1
          %p464 = scmp.lt.s32.totalorder %s37, 3
          %s465 = scalar_select %p464, %s37, 3
          %s466 = smul.addr %s463, 4
          %s467 = sadd.s32 %s465, %s466
          %s468 = smul.addr %s467, 8
          %s469 = scalar_lea.vmem %s1, %s468
        $region60: #{tpu_custom_call.1} parent=51 // pred_fallthru
          _
        // Predicated region
        $region61: #{tpu_custom_call.1} parent=51 // pred_check
          %p470 = pneg %p119
        $region62: #{tpu_custom_call.1} parent=51 // pred_check_branch
          %472 = sbr.rel (%p470) target = $region64
        $region63: #{tpu_custom_call.1} parent=51 // pred_region
          %s473 = sand.u32 %s109, 1
          %s474 = scalar_lea.sflag [#allocation4], %s473
          %s475 = sand.u32 %s109, 1
          %s476 = smul.addr %s475, 8
          %s477 = scalar_lea.vmem [#allocation3], %s476
          %s479 = ssub.s32 128, 128
          %480 = vsyncadd %s474, %s479
          %s481 = smul.addr %s36, 4
          %s482 = sadd.s32 %s37, %s481
          %s483 = smul.addr %s482, 128
          %s484 = scalar_lea.hbm %s2, %s483
          %s486 = sshll.u32 %s477, 4
          %s487 = int_to_ptr.vmem [resolvable:$true] %s486
          %489 = dma.hbm_to_vmem [thread:$0]  %s484, 128, %s487, %s474
        $region64: #{tpu_custom_call.1} parent=51 // pred_fallthru
          _
        // Predicated region
        $region65: #{tpu_custom_call.1} parent=51 // pred_check
          %p490 = pneg %p145
        $region66: #{tpu_custom_call.1} parent=51 // pred_check_branch
          %492 = sbr.rel (%p490) target = $region68
        $region67: #{tpu_custom_call.1} parent=51 // pred_region
          %s493 = sand.u32 %s29, 1
          %s494 = scalar_lea.sflag [#allocation7], %s493
          %s495 = sand.u32 %s135, 1
          %s496 = smul.addr %s495, 8
          %s497 = scalar_lea.vmem [#allocation6], %s496
          %s499 = ssub.s32 128, 128
          %500 = vsyncadd %s494, %s499
          %s501 = smul.addr %s36, 128
          %s502 = scalar_lea.hbm %s3, %s501
          %s504 = sshll.u32 %s497, 4
          %s505 = int_to_ptr.vmem [resolvable:$true] %s504
          %507 = dma.hbm_to_vmem [thread:$0]  %s502, 128, %s505, %s494
        $region68: #{tpu_custom_call.1} parent=51 // pred_fallthru
          _
        // Predicated region
        $region69: #{tpu_custom_call.1} parent=51 // pred_check
          %p508 = pneg %p171
        $region70: #{tpu_custom_call.1} parent=51 // pred_check_branch
          %510 = sbr.rel (%p508) target = $region72
        $region71: #{tpu_custom_call.1} parent=51 // pred_region
          %p511 = scmp.lt.s32.totalorder %s37, 3
          %s512 = scalar_select %p511, %s37, 3
          %s513 = smul.addr %s512, 8
          %s514 = scalar_lea.vmem %s4, %s513
        $region72: #{tpu_custom_call.1} parent=51 // pred_fallthru
          _
      $region52: #{tpu_custom_call.1} parent=5 // pred_fallthru
        _
      %p515 = scmp.le.s32.totalorder 1, %s29
      %p516 = scmp.lt.s32.totalorder %s29, 9
      %p517 = pnand %p515, %p516
      %p518 = pneg %p517
      // Predicated region
      $region73: #{tpu_custom_call.1} parent=5 // pred_check
        _
      $region74: #{tpu_custom_call.1} parent=5 // pred_check_branch
        %520 = sbr.rel (%p517) target = $region76
      $region75: #{tpu_custom_call.1} parent=5 // pred_region
        %s521 = ssub.s32 %s29, 1
        %s522 = sand.u32 %s112, 1
        %s523 = scalar_lea.sflag [#allocation4], %s522
        %s524 = sand.u32 %s112, 1
        %s525 = smul.addr %s524, 8
        %s526 = scalar_lea.vmem [#allocation3], %s525
        // Predicated region
        $region77: #{tpu_custom_call.1} parent=75 // pred_check
          %p527 = pneg %p125
        $region78: #{tpu_custom_call.1} parent=75 // pred_check_branch
          %529 = sbr.rel (%p527) target = $region80
        $region79: #{tpu_custom_call.1} parent=75 // pred_region
          %530 = dma.done %s523, 128
        $region80: #{tpu_custom_call.1} parent=75 // pred_fallthru
          _
        %s531 = sand.u32 %s34, 1
        %s532 = scalar_lea.sflag [#allocation7], %s531
        %s533 = sand.u32 %s138, 1
        %s534 = smul.addr %s533, 8
        %s535 = scalar_lea.vmem [#allocation6], %s534
        // Predicated region
        $region81: #{tpu_custom_call.1} parent=75 // pred_check
          %p536 = pneg %p151
        $region82: #{tpu_custom_call.1} parent=75 // pred_check_branch
          %538 = sbr.rel (%p536) target = $region84
        $region83: #{tpu_custom_call.1} parent=75 // pred_region
          %539 = dma.done %s532, 128
        $region84: #{tpu_custom_call.1} parent=75 // pred_fallthru
          _
        // Predicated region
        $region85: #{tpu_custom_call.1} parent=75 // pred_check
          %p540 = pneg %p261
        $region86: #{tpu_custom_call.1} parent=75 // pred_check_branch
          %542 = sbr.rel (%p540) target = $region88
        $region87: #{tpu_custom_call.1} parent=75 // pred_region
          %543 = dma.done [#allocation7], 512
        $region88: #{tpu_custom_call.1} parent=75 // pred_fallthru
          _
        %p544 = scmp.lt.s32.totalorder %s38, 1
        %s545 = scalar_select %p544, %s38, 1
        %p546 = scmp.lt.s32.totalorder %s39, 3
        %s547 = scalar_select %p546, %s39, 3
        %s548 = smul.addr %s545, 4
        %s549 = sadd.s32 %s547, %s548
        %s550 = smul.addr %s549, 8
        %s551 = scalar_lea.vmem %s0, %s550
        %p552 = pneg %p69
        %p553 = pneg %p66
        %p554 = scmp.lt.s32.totalorder %s38, 1
        %s555 = scalar_select %p554, %s38, 1
        %p556 = scmp.lt.s32.totalorder %s39, 3
        %s557 = scalar_select %p556, %s39, 3
        %s558 = smul.addr %s555, 4
        %s559 = sadd.s32 %s557, %s558
        %s560 = smul.addr %s559, 8
        %s561 = scalar_lea.vmem %s1, %s560
        %p562 = pneg %p97
        %p563 = pneg %p94
        %s564 = sand.u32 %s112, 1
        %s565 = scalar_lea.sflag [#allocation4], %s564
        %s566 = sand.u32 %s112, 1
        %s567 = smul.addr %s566, 8
        %s568 = scalar_lea.vmem [#allocation3], %s567
        %p569 = pneg %p125
        %p570 = pneg %p122
        %s571 = sand.u32 %s34, 1
        %s572 = scalar_lea.sflag [#allocation7], %s571
        %s573 = sand.u32 %s138, 1
        %s574 = smul.addr %s573, 8
        %s575 = scalar_lea.vmem [#allocation6], %s574
        %p576 = pneg %p151
        %p577 = pneg %p148
        %p578 = scmp.lt.s32.totalorder %s39, 3
        %s579 = scalar_select %p578, %s39, 3
        %s580 = smul.addr %s579, 8
        %s581 = scalar_lea.vmem %s4, %s580
        %p582 = pneg %p177
        %p583 = pneg %p174
        %p584 = pneg %p198
        %p585 = pneg %p195
        %p586 = pneg %p219
        %p587 = pneg %p216
        %p588 = pneg %p240
        %p589 = pneg %p237
        %p590 = pneg %p261
        %p591 = pneg %p258
        %p592 = pneg %p282
        %p593 = pneg %p279
        %p594 = pneg %p303
        %p595 = pneg %p300
        %p596 = pneg %p324
        %p597 = pneg %p321
        %p598 = pneg %p345
        %p599 = pneg %p342
        %p600 = pneg %p366
        %p601 = pneg %p363
        %p602 = pneg %p392
        %p603 = pneg %p389
        %s604 = sand.u32 %s379, 1
        %s605 = scalar_lea.sflag [#allocation5], %s604
        %s606 = sand.u32 %s379, 1
        %s607 = smul.addr %s606, 8
        %s608 = scalar_lea.vmem [#allocation9], %s607
        %p609 = scmp.lt.s32.totalorder %s38, 1
        %s610 = scalar_select %p609, %s38, 1
        %p611 = scmp.lt.s32.totalorder %s39, 3
        %s612 = scalar_select %p611, %s39, 3
        %s613 = smul.addr %s610, 4
        %s614 = sadd.s32 %s612, %s613
        %s615 = smul.addr %s614, 8
        %s616 = scalar_lea.vmem %s0, %s615
        %p617 = scmp.lt.s32.totalorder %s38, 1
        %s618 = scalar_select %p617, %s38, 1
        %p619 = scmp.lt.s32.totalorder %s39, 3
        %s620 = scalar_select %p619, %s39, 3
        %s621 = smul.addr %s618, 4
        %s622 = sadd.s32 %s620, %s621
        %s623 = smul.addr %s622, 8
        %s624 = scalar_lea.vmem %s1, %s623
        %p625 = scmp.lt.s32.totalorder %s39, 3
        %s626 = scalar_select %p625, %s39, 3
        %s627 = smul.addr %s626, 8
        %s628 = scalar_lea.vmem %s4, %s627
        %p629 = scmp.eq.s32.totalorder %s39, 0
        // Predicated region
        $region89: #{tpu_custom_call.1} parent=75 // pred_check
          %p630 = pneg %p629
        $region90: #{tpu_custom_call.1} parent=75 // pred_check_branch
          %632 = sbr.rel (%p630) target = $region92
        $region91: #{tpu_custom_call.1} parent=75 // pred_region
          %vm633 = vcmask 261120
          %634 = vst.msk [vmem:[#allocation2] sm:$0xff] %vm633, 0.0
        $region92: #{tpu_custom_call.1} parent=75 // pred_fallthru
          _
        %v635 = vld [vmem:[%s526] sm:$0xff]
        %v636 = vmul.f32 %v635, 0.17677669
        %v637 = vld [vmem:[%s624] sm:$0xff]
        %v638 = vld [vmem:[%s616] sm:$0xff]
        %vm639 = vcmask 64512
        %v641 = vsel %vm639, %v636, 0
        %v644 = vsel %vm639, %v637, 0
        %646 = vmatprep.subr.mxu0 0.0
        %647 = vmatpush1.xpose.msra.mxu0 0.0
        %648 = vmatprep.subr.mxu0 0.0
        %649 = vmatpush1.xpose.msra.mxu0 0.0
        %650 = vmatprep.subr.mxu0 0.0
        %651 = vmatpush1.xpose.msra.mxu0 0.0
        %652 = vmatprep.subr.mxu0 0.0
        %653 = vmatpush1.xpose.msra.mxu0 0.0
        %654 = vmatprep.subr.mxu0 0.0
        %655 = vmatpush1.xpose.msra.mxu0 0.0
        %656 = vmatprep.subr.mxu0 0.0
        %657 = vmatpush1.xpose.msra.mxu0 0.0
        %658 = vmatprep.subr.mxu0 0.0
        %659 = vmatpush1.xpose.msra.mxu0 0.0
        %660 = vmatprep.subr.mxu0 0.0
        %661 = vmatpush1.xpose.msra.mxu0 0.0
        %662 = vmatprep.subr.mxu0 0.0
        %663 = vmatpush1.xpose.msra.mxu0 0.0
        %664 = vmatprep.subr.mxu0 0.0
        %665 = vmatpush1.xpose.msra.mxu0 0.0
        %666 = vmatprep.subr.mxu0 0.0
        %667 = vmatpush1.xpose.msra.mxu0 0.0
        %668 = vmatprep.subr.mxu0 0.0
        %669 = vmatpush1.xpose.msra.mxu0 0.0
        %670 = vmatprep.subr.mxu0 0.0
        %671 = vmatpush1.xpose.msra.mxu0 0.0
        %672 = vmatprep.subr.mxu0 0.0
        %673 = vmatpush1.xpose.msra.mxu0 0.0
        %674 = vmatprep.subr.mxu0 0.0
        %675 = vmatpush1.xpose.msra.mxu0 0.0
        %676 = vmatprep.subr.mxu0 0.0
        %677 = vmatpush1.xpose.msra.mxu0 %v644
        %678 = vmatprep.subr.mxu0 0.0
        %679 = vmatpush2.xpose.msra.mxu0 0.0
        %680 = vmatprep.subr.mxu0 0.0
        %681 = vmatpush2.xpose.msra.mxu0 0.0
        %682 = vmatprep.subr.mxu0 0.0
        %683 = vmatpush2.xpose.msra.mxu0 0.0
        %684 = vmatprep.subr.mxu0 0.0
        %685 = vmatpush2.xpose.msra.mxu0 0.0
        %686 = vmatprep.subr.mxu0 0.0
        %687 = vmatpush2.xpose.msra.mxu0 0.0
        %688 = vmatprep.subr.mxu0 0.0
        %689 = vmatpush2.xpose.msra.mxu0 0.0
        %690 = vmatprep.subr.mxu0 0.0
        %691 = vmatpush2.xpose.msra.mxu0 0.0
        %692 = vmatprep.subr.mxu0 0.0
        %693 = vmatpush2.xpose.msra.mxu0 0.0
        %694 = vmatprep.subr.mxu0 0.0
        %695 = vmatpush2.xpose.msra.mxu0 0.0
        %696 = vmatprep.subr.mxu0 0.0
        %697 = vmatpush2.xpose.msra.mxu0 0.0
        %698 = vmatprep.subr.mxu0 0.0
        %699 = vmatpush2.xpose.msra.mxu0 0.0
        %700 = vmatprep.subr.mxu0 0.0
        %701 = vmatpush2.xpose.msra.mxu0 0.0
        %702 = vmatprep.subr.mxu0 0.0
        %703 = vmatpush2.xpose.msra.mxu0 0.0
        %704 = vmatprep.subr.mxu0 0.0
        %705 = vmatpush2.xpose.msra.mxu0 0.0
        %706 = vmatprep.subr.mxu0 0.0
        %707 = vmatpush2.xpose.msra.mxu0 0.0
        %708 = vmatprep.subr.mxu0 0.0
        %709 = vmatpush2.xpose.msra.mxu0 0.0
        %710 = vmatprep.mubr.f32.mxu0 0.0
        %711 = vmatmul.mubr.f32.gmra.mxu0 %v641
        %v712 = vpop.f32.mrf.mxu0
        %v713 = vadd.f32 0.0, %v712
        %v714 = vpop.f32.mrf.mxu0
        %715 = vdwg.mxu0
        %v716 = vsel %vm639, %v713, -inf
        %717 = vmax.xlane.f32.xlu0 %v716
        %v718 = vpop.xlane.xlu0 %717
        %v719 = vsub.f32 %v713, %v718
        %v720 = vmul.f32 %v719, 1.442695
        %v721 = vpow.pop %v720
        %v722 = vsel %vm639, %v721, 0.0
        %723 = vadd.xlane.f32.xlu0 %v722
        %v724 = vpop.xlane.xlu0 %723
        %v726 = vsel %vm639, %v721, 0
        %728 = vmatprep.subr.mxu0 0.0
        %729 = vmatpush1.msra.mxu0 0.0
        %730 = vmatprep.subr.mxu0 0.0
        %731 = vmatpush1.msra.mxu0 0.0
        %732 = vmatprep.subr.mxu0 0.0
        %733 = vmatpush1.msra.mxu0 0.0
        %734 = vmatprep.subr.mxu0 0.0
        %735 = vmatpush1.msra.mxu0 0.0
        %736 = vmatprep.subr.mxu0 0.0
        %737 = vmatpush1.msra.mxu0 0.0
        %738 = vmatprep.subr.mxu0 0.0
        %739 = vmatpush1.msra.mxu0 0.0
        %740 = vmatprep.subr.mxu0 0.0
        %741 = vmatpush1.msra.mxu0 0.0
        %742 = vmatprep.subr.mxu0 0.0
        %743 = vmatpush1.msra.mxu0 0.0
        %744 = vmatprep.subr.mxu0 0.0
        %745 = vmatpush1.msra.mxu0 0.0
        %746 = vmatprep.subr.mxu0 0.0
        %747 = vmatpush1.msra.mxu0 0.0
        %748 = vmatprep.subr.mxu0 0.0
        %749 = vmatpush1.msra.mxu0 0.0
        %750 = vmatprep.subr.mxu0 0.0
        %751 = vmatpush1.msra.mxu0 0.0
        %752 = vmatprep.subr.mxu0 0.0
        %753 = vmatpush1.msra.mxu0 0.0
        %754 = vmatprep.subr.mxu0 0.0
        %755 = vmatpush1.msra.mxu0 0.0
        %756 = vmatprep.subr.mxu0 0.0
        %757 = vmatpush1.msra.mxu0 0.0
        %758 = vmatprep.subr.mxu0 0.0
        %759 = vmatpush1.msra.mxu0 %v638
        %760 = vmatprep.subr.mxu0 0.0
        %761 = vmatpush2.msra.mxu0 0.0
        %762 = vmatprep.subr.mxu0 0.0
        %763 = vmatpush2.msra.mxu0 0.0
        %764 = vmatprep.subr.mxu0 0.0
        %765 = vmatpush2.msra.mxu0 0.0
        %766 = vmatprep.subr.mxu0 0.0
        %767 = vmatpush2.msra.mxu0 0.0
        %768 = vmatprep.subr.mxu0 0.0
        %769 = vmatpush2.msra.mxu0 0.0
        %770 = vmatprep.subr.mxu0 0.0
        %771 = vmatpush2.msra.mxu0 0.0
        %772 = vmatprep.subr.mxu0 0.0
        %773 = vmatpush2.msra.mxu0 0.0
        %774 = vmatprep.subr.mxu0 0.0
        %775 = vmatpush2.msra.mxu0 0.0
        %776 = vmatprep.subr.mxu0 0.0
        %777 = vmatpush2.msra.mxu0 0.0
        %778 = vmatprep.subr.mxu0 0.0
        %779 = vmatpush2.msra.mxu0 0.0
        %780 = vmatprep.subr.mxu0 0.0
        %781 = vmatpush2.msra.mxu0 0.0
        %782 = vmatprep.subr.mxu0 0.0
        %783 = vmatpush2.msra.mxu0 0.0
        %784 = vmatprep.subr.mxu0 0.0
        %785 = vmatpush2.msra.mxu0 0.0
        %786 = vmatprep.subr.mxu0 0.0
        %787 = vmatpush2.msra.mxu0 0.0
        %788 = vmatprep.subr.mxu0 0.0
        %789 = vmatpush2.msra.mxu0 0.0
        %790 = vmatprep.subr.mxu0 0.0
        %791 = vmatpush2.msra.mxu0 0.0
        %792 = vmatprep.mubr.f32.mxu0 0.0
        %793 = vmatmul.mubr.f32.gmra.mxu0 %v726
        %v794 = vpop.f32.mrf.mxu0
        %v795 = vadd.f32 0.0, %v794
        %v796 = vpop.f32.mrf.mxu0
        %797 = vdwg.mxu0
        %v798 = vrcp.pop %v724
        %v799 = vmul.f32 %v795, %v798
        %v800 = vld [vmem:[#allocation2] sm:$0xff]
        %v801 = vld [vmem:[%s628] sm:$0xff]
        %v803 = vsel %vm639, %v799, 0
        %805 = vmatprep.subr.mxu0 0.0
        %806 = vmatpush1.msra.mxu0 0.0
        %807 = vmatprep.subr.mxu0 0.0
        %808 = vmatpush1.msra.mxu0 0.0
        %809 = vmatprep.subr.mxu0 0.0
        %810 = vmatpush1.msra.mxu0 0.0
        %811 = vmatprep.subr.mxu0 0.0
        %812 = vmatpush1.msra.mxu0 0.0
        %813 = vmatprep.subr.mxu0 0.0
        %814 = vmatpush1.msra.mxu0 0.0
        %815 = vmatprep.subr.mxu0 0.0
        %816 = vmatpush1.msra.mxu0 0.0
        %817 = vmatprep.subr.mxu0 0.0
        %818 = vmatpush1.msra.mxu0 0.0
        %819 = vmatprep.subr.mxu0 0.0
        %820 = vmatpush1.msra.mxu0 0.0
        %821 = vmatprep.subr.mxu0 0.0
        %822 = vmatpush1.msra.mxu0 0.0
        %823 = vmatprep.subr.mxu0 0.0
        %824 = vmatpush1.msra.mxu0 0.0
        %825 = vmatprep.subr.mxu0 0.0
        %826 = vmatpush1.msra.mxu0 0.0
        %827 = vmatprep.subr.mxu0 0.0
        %828 = vmatpush1.msra.mxu0 0.0
        %829 = vmatprep.subr.mxu0 0.0
        %830 = vmatpush1.msra.mxu0 0.0
        %831 = vmatprep.subr.mxu0 0.0
        %832 = vmatpush1.msra.mxu0 0.0
        %833 = vmatprep.subr.mxu0 0.0
        %834 = vmatpush1.msra.mxu0 0.0
        %835 = vmatprep.subr.mxu0 0.0
        %836 = vmatpush1.msra.mxu0 %v801
        %837 = vmatprep.subr.mxu0 0.0
        %838 = vmatpush2.msra.mxu0 0.0
        %839 = vmatprep.subr.mxu0 0.0
        %840 = vmatpush2.msra.mxu0 0.0
        %841 = vmatprep.subr.mxu0 0.0
        %842 = vmatpush2.msra.mxu0 0.0
        %843 = vmatprep.subr.mxu0 0.0
        %844 = vmatpush2.msra.mxu0 0.0
        %845 = vmatprep.subr.mxu0 0.0
        %846 = vmatpush2.msra.mxu0 0.0
        %847 = vmatprep.subr.mxu0 0.0
        %848 = vmatpush2.msra.mxu0 0.0
        %849 = vmatprep.subr.mxu0 0.0
        %850 = vmatpush2.msra.mxu0 0.0
        %851 = vmatprep.subr.mxu0 0.0
        %852 = vmatpush2.msra.mxu0 0.0
        %853 = vmatprep.subr.mxu0 0.0
        %854 = vmatpush2.msra.mxu0 0.0
        %855 = vmatprep.subr.mxu0 0.0
        %856 = vmatpush2.msra.mxu0 0.0
        %857 = vmatprep.subr.mxu0 0.0
        %858 = vmatpush2.msra.mxu0 0.0
        %859 = vmatprep.subr.mxu0 0.0
        %860 = vmatpush2.msra.mxu0 0.0
        %861 = vmatprep.subr.mxu0 0.0
        %862 = vmatpush2.msra.mxu0 0.0
        %863 = vmatprep.subr.mxu0 0.0
        %864 = vmatpush2.msra.mxu0 0.0
        %865 = vmatprep.subr.mxu0 0.0
        %866 = vmatpush2.msra.mxu0 0.0
        %867 = vmatprep.subr.mxu0 0.0
        %868 = vmatpush2.msra.mxu0 0.0
        %869 = vmatprep.mubr.f32.mxu0 0.0
        %870 = vmatmul.mubr.f32.gmra.mxu0 %v803
        %v871 = vpop.f32.mrf.mxu0
        %v872 = vadd.f32 0.0, %v871
        %v873 = vpop.f32.mrf.mxu0
        %874 = vdwg.mxu0
        %v875 = vadd.f32 %v800, %v872
        %vm876 = vcmask 261120
        %877 = vst.msk [vmem:[#allocation2] sm:$0xff] %vm876, %v875
        %p878 = scmp.eq.s32.totalorder %s39, 3
        // Predicated region
        $region93: #{tpu_custom_call.1} parent=75 // pred_check
          %p879 = pneg %p878
        $region94: #{tpu_custom_call.1} parent=75 // pred_check_branch
          %881 = sbr.rel (%p879) target = $region96
        $region95: #{tpu_custom_call.1} parent=75 // pred_region
          %v882 = vld [vmem:[#allocation2] sm:$0xff]
          %v883 = vld [vmem:[%s5] sm:$0x1]
          %v885 = vlaneseq
          %v886 = vshrl.u32 %v885, 7
          %v887 = vsub.s32 0, %v886
          %v888 = vrot.slane %v883, %v887
          %v890 = vadd.f32 %v882, %v888
          %v891 = vld [vmem:[%s535] sm:$0xff]
          %v892 = vadd.f32 %v890, %v891
          %v893 = vld [vmem:[%s6] sm:$0x1]
          %v894 = vld [vmem:[%s7] sm:$0x1]
          %v895 = vsel %vm876, %v892, 0.0
          %896 = vadd.xlane.f32.xlu0 %v895
          %v897 = vpop.xlane.xlu0 %896
          %v898 = vrcp.pop 32.0
          %v899 = vmul.f32 %v897, %v898
          %v900 = vsub.f32 %v892, %v899
          %v901 = vmul.f32 %v900, %v900
          %v902 = vsel %vm876, %v901, 0.0
          %903 = vadd.xlane.f32.xlu0 %v902
          %v904 = vpop.xlane.xlu0 %903
          %v905 = vmul.f32 %v904, %v898
          %v906 = vadd.f32 %v905, 1e-05
          %v907 = vrsqrt.pop %v906
          %v908 = vmul.f32 %v900, %v907
          %v910 = vlaneseq
          %v911 = vshrl.u32 %v910, 7
          %v912 = vsub.s32 0, %v911
          %v913 = vrot.slane %v893, %v912
          %v915 = vmul.f32 %v908, %v913
          %v917 = vlaneseq
          %v918 = vshrl.u32 %v917, 7
          %v919 = vsub.s32 0, %v918
          %v920 = vrot.slane %v894, %v919
          %v922 = vadd.f32 %v915, %v920
          %v923 = vld [vmem:[#allocation8] sm:$0xff]
          %v924 = vld [vmem:[#allocation8 + $0x8] sm:$0xff]
          %v925 = vld [vmem:[#allocation8 + $0x10] sm:$0xff]
          %v926 = vld [vmem:[#allocation8 + $0x18] sm:$0xff]
          %v927 = vld [vmem:[%s9] sm:$0x1]
          %v929 = vlaneseq
          %v930 = vshrl.u32 %v929, 7
          %v931 = vsub.s32 0, %v930
          %v932 = vrot.slane %v927, %v931
          %v935 = vsel %vm876, %v922, 0
          %937 = vmatprep.subr.mxu0 0.0
          %938 = vmatpush1.msra.mxu0 0.0
          %939 = vmatprep.subr.mxu0 0.0
          %940 = vmatpush1.msra.mxu0 0.0
          %941 = vmatprep.subr.mxu0 0.0
          %942 = vmatpush1.msra.mxu0 0.0
          %943 = vmatprep.subr.mxu0 0.0
          %944 = vmatpush1.msra.mxu0 0.0
          %945 = vmatprep.subr.mxu0 0.0
          %946 = vmatpush1.msra.mxu0 0.0
          %947 = vmatprep.subr.mxu0 0.0
          %948 = vmatpush1.msra.mxu0 0.0
          %949 = vmatprep.subr.mxu0 0.0
          %950 = vmatpush1.msra.mxu0 0.0
          %951 = vmatprep.subr.mxu0 0.0
          %952 = vmatpush1.msra.mxu0 0.0
          %953 = vmatprep.subr.mxu0 0.0
          %954 = vmatpush1.msra.mxu0 0.0
          %955 = vmatprep.subr.mxu0 0.0
          %956 = vmatpush1.msra.mxu0 0.0
          %957 = vmatprep.subr.mxu0 0.0
          %958 = vmatpush1.msra.mxu0 0.0
          %959 = vmatprep.subr.mxu0 0.0
          %960 = vmatpush1.msra.mxu0 0.0
          %961 = vmatprep.subr.mxu0 0.0
          %962 = vmatpush1.msra.mxu0 %v926
          %963 = vmatprep.subr.mxu0 0.0
          %964 = vmatpush1.msra.mxu0 %v925
          %965 = vmatprep.subr.mxu0 0.0
          %966 = vmatpush1.msra.mxu0 %v924
          %967 = vmatprep.subr.mxu0 0.0
          %968 = vmatpush1.msra.mxu0 %v923
          %969 = vmatprep.subr.mxu0 0.0
          %970 = vmatpush2.msra.mxu0 0.0
          %971 = vmatprep.subr.mxu0 0.0
          %972 = vmatpush2.msra.mxu0 0.0
          %973 = vmatprep.subr.mxu0 0.0
          %974 = vmatpush2.msra.mxu0 0.0
          %975 = vmatprep.subr.mxu0 0.0
          %976 = vmatpush2.msra.mxu0 0.0
          %977 = vmatprep.subr.mxu0 0.0
          %978 = vmatpush2.msra.mxu0 0.0
          %979 = vmatprep.subr.mxu0 0.0
          %980 = vmatpush2.msra.mxu0 0.0
          %981 = vmatprep.subr.mxu0 0.0
          %982 = vmatpush2.msra.mxu0 0.0
          %983 = vmatprep.subr.mxu0 0.0
          %984 = vmatpush2.msra.mxu0 0.0
          %985 = vmatprep.subr.mxu0 0.0
          %986 = vmatpush2.msra.mxu0 0.0
          %987 = vmatprep.subr.mxu0 0.0
          %988 = vmatpush2.msra.mxu0 0.0
          %989 = vmatprep.subr.mxu0 0.0
          %990 = vmatpush2.msra.mxu0 0.0
          %991 = vmatprep.subr.mxu0 0.0
          %992 = vmatpush2.msra.mxu0 0.0
          %993 = vmatprep.subr.mxu0 0.0
          %994 = vmatpush2.msra.mxu0 0.0
          %995 = vmatprep.subr.mxu0 0.0
          %996 = vmatpush2.msra.mxu0 0.0
          %997 = vmatprep.subr.mxu0 0.0
          %998 = vmatpush2.msra.mxu0 0.0
          %999 = vmatprep.subr.mxu0 0.0
          %1000 = vmatpush2.msra.mxu0 0.0
          %1001 = vmatprep.mubr.f32.mxu0 0.0
          %1002 = vmatmul.mubr.f32.gmra.mxu0 %v935
          %v1003 = vpop.f32.mrf.mxu0
          %v1004 = vadd.f32 %v932, %v1003
          %v1005 = vpop.f32.mrf.mxu0
          %1006 = vdwg.mxu0
          %v1007 = vmax.f32 %v1004, 0.0
          %v1008 = vld [vmem:[%s10] sm:$0xff]
          %v1009 = vld [vmem:[%s10 + $0x8] sm:$0xff]
          %v1010 = vld [vmem:[%s10 + $0x10] sm:$0xff]
          %v1011 = vld [vmem:[%s10 + $0x18] sm:$0xff]
          %v1012 = vld [vmem:[%s10 + $0x20] sm:$0xff]
          %v1013 = vld [vmem:[%s10 + $0x28] sm:$0xff]
          %v1014 = vld [vmem:[%s10 + $0x30] sm:$0xff]
          %v1015 = vld [vmem:[%s10 + $0x38] sm:$0xff]
          %v1016 = vld [vmem:[%s10 + $0x40] sm:$0xff]
          %v1017 = vld [vmem:[%s10 + $0x48] sm:$0xff]
          %v1018 = vld [vmem:[%s10 + $0x50] sm:$0xff]
          %v1019 = vld [vmem:[%s10 + $0x58] sm:$0xff]
          %v1020 = vld [vmem:[%s10 + $0x60] sm:$0xff]
          %v1021 = vld [vmem:[%s10 + $0x68] sm:$0xff]
          %v1022 = vld [vmem:[%s10 + $0x70] sm:$0xff]
          %v1023 = vld [vmem:[%s10 + $0x78] sm:$0xff]
          %v1024 = vld [vmem:[%s11] sm:$0x1]
          %v1026 = vlaneseq
          %v1027 = vshrl.u32 %v1026, 7
          %v1028 = vsub.s32 0, %v1027
          %v1029 = vrot.slane %v1024, %v1028
          %1031 = vmatprep.subr.mxu0 0.0
          %1032 = vmatpush1.msra.mxu0 %v1023
          %1033 = vmatprep.subr.mxu0 0.0
          %1034 = vmatpush1.msra.mxu0 %v1022
          %1035 = vmatprep.subr.mxu0 0.0
          %1036 = vmatpush1.msra.mxu0 %v1021
          %1037 = vmatprep.subr.mxu0 0.0
          %1038 = vmatpush1.msra.mxu0 %v1020
          %1039 = vmatprep.subr.mxu0 0.0
          %1040 = vmatpush1.msra.mxu0 %v1019
          %1041 = vmatprep.subr.mxu0 0.0
          %1042 = vmatpush1.msra.mxu0 %v1018
          %1043 = vmatprep.subr.mxu0 0.0
          %1044 = vmatpush1.msra.mxu0 %v1017
          %1045 = vmatprep.subr.mxu0 0.0
          %1046 = vmatpush1.msra.mxu0 %v1016
          %1047 = vmatprep.subr.mxu0 0.0
          %1048 = vmatpush1.msra.mxu0 %v1015
          %1049 = vmatprep.subr.mxu0 0.0
          %1050 = vmatpush1.msra.mxu0 %v1014
          %1051 = vmatprep.subr.mxu0 0.0
          %1052 = vmatpush1.msra.mxu0 %v1013
          %1053 = vmatprep.subr.mxu0 0.0
          %1054 = vmatpush1.msra.mxu0 %v1012
          %1055 = vmatprep.subr.mxu0 0.0
          %1056 = vmatpush1.msra.mxu0 %v1011
          %1057 = vmatprep.subr.mxu0 0.0
          %1058 = vmatpush1.msra.mxu0 %v1010
          %1059 = vmatprep.subr.mxu0 0.0
          %1060 = vmatpush1.msra.mxu0 %v1009
          %1061 = vmatprep.subr.mxu0 0.0
          %1062 = vmatpush1.msra.mxu0 %v1008
          %1063 = vmatprep.subr.mxu0 0.0
          %1064 = vmatpush2.msra.mxu0 0.0
          %1065 = vmatprep.subr.mxu0 0.0
          %1066 = vmatpush2.msra.mxu0 0.0
          %1067 = vmatprep.subr.mxu0 0.0
          %1068 = vmatpush2.msra.mxu0 0.0
          %1069 = vmatprep.subr.mxu0 0.0
          %1070 = vmatpush2.msra.mxu0 0.0
          %1071 = vmatprep.subr.mxu0 0.0
          %1072 = vmatpush2.msra.mxu0 0.0
          %1073 = vmatprep.subr.mxu0 0.0
          %1074 = vmatpush2.msra.mxu0 0.0
          %1075 = vmatprep.subr.mxu0 0.0
          %1076 = vmatpush2.msra.mxu0 0.0
          %1077 = vmatprep.subr.mxu0 0.0
          %1078 = vmatpush2.msra.mxu0 0.0
          %1079 = vmatprep.subr.mxu0 0.0
          %1080 = vmatpush2.msra.mxu0 0.0
          %1081 = vmatprep.subr.mxu0 0.0
          %1082 = vmatpush2.msra.mxu0 0.0
          %1083 = vmatprep.subr.mxu0 0.0
          %1084 = vmatpush2.msra.mxu0 0.0
          %1085 = vmatprep.subr.mxu0 0.0
          %1086 = vmatpush2.msra.mxu0 0.0
          %1087 = vmatprep.subr.mxu0 0.0
          %1088 = vmatpush2.msra.mxu0 0.0
          %1089 = vmatprep.subr.mxu0 0.0
          %1090 = vmatpush2.msra.mxu0 0.0
          %1091 = vmatprep.subr.mxu0 0.0
          %1092 = vmatpush2.msra.mxu0 0.0
          %1093 = vmatprep.subr.mxu0 0.0
          %1094 = vmatpush2.msra.mxu0 0.0
          %1095 = vmatprep.mubr.f32.mxu0 0.0
          %1096 = vmatmul.mubr.f32.gmra.mxu0 %v1007
          %v1097 = vpop.f32.mrf.mxu0
          %v1098 = vadd.f32 %v1029, %v1097
          %v1099 = vpop.f32.mrf.mxu0
          %1100 = vdwg.mxu0
          %v1101 = vadd.f32 %v1098, %v922
          %v1102 = vld [vmem:[%s12] sm:$0x1]
          %v1103 = vld [vmem:[%s13] sm:$0x1]
          %v1104 = vsel %vm876, %v1101, 0.0
          %1105 = vadd.xlane.f32.xlu0 %v1104
          %v1106 = vpop.xlane.xlu0 %1105
          %v1107 = vmul.f32 %v1106, %v898
          %v1108 = vsub.f32 %v1101, %v1107
          %v1109 = vmul.f32 %v1108, %v1108
          %v1110 = vsel %vm876, %v1109, 0.0
          %1111 = vadd.xlane.f32.xlu0 %v1110
          %v1112 = vpop.xlane.xlu0 %1111
          %v1113 = vmul.f32 %v1112, %v898
          %v1114 = vadd.f32 %v1113, 1e-05
          %v1115 = vrsqrt.pop %v1114
          %v1116 = vmul.f32 %v1108, %v1115
          %v1118 = vlaneseq
          %v1119 = vshrl.u32 %v1118, 7
          %v1120 = vsub.s32 0, %v1119
          %v1121 = vrot.slane %v1102, %v1120
          %v1123 = vmul.f32 %v1116, %v1121
          %v1125 = vlaneseq
          %v1126 = vshrl.u32 %v1125, 7
          %v1127 = vsub.s32 0, %v1126
          %v1128 = vrot.slane %v1103, %v1127
          %v1130 = vadd.f32 %v1123, %v1128
          %1131 = vst.msk [vmem:[%s608] sm:$0xff] %vm876, %v1130
        $region96: #{tpu_custom_call.1} parent=75 // pred_fallthru
          _
        %s1132 = sand.u32 %s379, 1
        %s1133 = scalar_lea.sflag [#allocation5], %s1132
        %s1134 = sand.u32 %s379, 1
        %s1135 = smul.addr %s1134, 8
        %s1136 = scalar_lea.vmem [#allocation9], %s1135
        // Predicated region
        $region97: #{tpu_custom_call.1} parent=75 // pred_check
          %p1137 = pneg %p389
        $region98: #{tpu_custom_call.1} parent=75 // pred_check_branch
          %1139 = sbr.rel (%p1137) target = $region100
        $region99: #{tpu_custom_call.1} parent=75 // pred_region
          %s1141 = ssub.s32 128, 128
          %1142 = vsyncadd %s1133, %s1141
          %s1143 = smul.addr %s38, 128
          %s1144 = scalar_lea.hbm %s14, %s1143
          %s1146 = sshll.u32 %s1136, 4
          %s1147 = int_to_ptr.vmem [resolvable:$true] %s1146
          %1149 = dma.vmem_to_hbm [thread:$0]  %s1147, 128, %s1144, %s1133
        $region100: #{tpu_custom_call.1} parent=75 // pred_fallthru
          _
      $region76: #{tpu_custom_call.1} parent=5 // pred_fallthru
        _
      %p1150 = scmp.le.s32.totalorder 2, %s29
      // Predicated region
      $region101: #{tpu_custom_call.1} parent=5 // pred_check
        %p1151 = pneg %p1150
      $region102: #{tpu_custom_call.1} parent=5 // pred_check_branch
        %1153 = sbr.rel (%p1151) target = $region104
      $region103: #{tpu_custom_call.1} parent=5 // pred_region
        %s1154 = ssub.s32 %s29, 2
        // Predicated region
        $region105: #{tpu_custom_call.1} parent=103 // pred_check
          %p1155 = pneg %p395
        $region106: #{tpu_custom_call.1} parent=103 // pred_check_branch
          %1157 = sbr.rel (%p1155) target = $region108
        $region107: #{tpu_custom_call.1} parent=103 // pred_region
          %s1158 = sand.u32 %s380, 1
          %s1159 = scalar_lea.sflag [#allocation5], %s1158
          %s1160 = sand.u32 %s380, 1
          %s1161 = smul.addr %s1160, 8
          %s1162 = scalar_lea.vmem [#allocation9], %s1161
          %1163 = dma.done %s1159, 128
        $region108: #{tpu_custom_call.1} parent=103 // pred_fallthru
          _
      $region104: #{tpu_custom_call.1} parent=5 // pred_fallthru
        _
    $region6: #{tpu_custom_call.1} parent=1 // loop_footer
      %s33 = sadd.s32 1, %s29
    $region7: #{tpu_custom_call.1} parent=1 // loop_footer_branch
      %28 = sbr.rel target = $region3
    $region8: #{tpu_custom_call.1} parent=1 // loop_exit
      _
    %1164 = vsyncpa [#allocation4], 1
    %s1165 = scalar_lea.sflag [#allocation4], 1
    %1166 = vsyncpa %s1165, 1
    %1167 = vsyncpa [#allocation7], 1
    %s1168 = scalar_lea.sflag [#allocation7], 1
    %1169 = vsyncpa %s1168, 1
    %1170 = vsyncpa [#allocation5], 1
    %s1171 = scalar_lea.sflag [#allocation5], 1
    %1172 = vsyncpa %s1171, 1

</llo_original>
